<compile_context>
chip_gen: v7x
topology: tpu7x:2x2x1
jax: 0.10.0
libtpu: 0.0.40
codegen_flags: <defaults>
</compile_context>

<pallas_src>
import functools

import jax
import jax.numpy as jnp
from jax.experimental import pallas as pl
from jax.experimental.pallas import tpu as pltpu


# ----------------------------- kernel -----------------------------

def _mha_kernel(kvlen_ref,                        # SMEM [B] int32 (scalar prefetch)
                q_ref, k_ref, v_ref,              # (1,tq,H) / (1,tk,H) f32 activations
                wq_ref, wk_ref, wv_ref, wo_ref,   # bf16 weights (scale folded into wq)
                out_ref, *rest,
                num_heads, dk, dv, with_attn):
    if with_attn:
        attn_ref, q_scr, m_scr, l_scr, acc_scr = rest
    else:
        attn_ref = None
        q_scr, m_scr, l_scr, acc_scr = rest

    b = pl.program_id(0)
    ki = pl.program_id(2)
    nk = pl.num_programs(2)
    tq = q_ref.shape[1]
    tk = k_ref.shape[1]

    # ---- per (b, q-tile): project Q once (bf16 operands, f32 MXU acc), reset flash state
    @pl.when(ki == 0)
    def _():
        q_scr[...] = jnp.dot(q_ref[0].astype(jnp.bfloat16), wq_ref[...],
                             preferred_element_type=jnp.float32)          # [tq, nH*dk]
        m_scr[...] = jnp.full_like(m_scr, -jnp.inf)
        l_scr[...] = jnp.zeros_like(l_scr)
        acc_scr[...] = jnp.zeros_like(acc_scr)

    # ---- fused all-head K/V projections for this key tile ----
    k_all = jnp.dot(k_ref[0].astype(jnp.bfloat16), wk_ref[...],
                    preferred_element_type=jnp.float32)                   # [tk, nH*dk]
    v_all = jnp.dot(v_ref[0].astype(jnp.bfloat16), wv_ref[...],
                    preferred_element_type=jnp.float32)                   # [tk, nH*dv]
    q_all = q_scr[...]                                                    # [tq, nH*dk]

    # ---- key-padding mask rebuilt in-kernel (no dense mask in HBM) ----
    klen = kvlen_ref[b]
    kpos = ki * tk + jax.lax.broadcasted_iota(jnp.int32, (tq, tk), 1)
    masked = kpos >= klen
    neg = jnp.float32(-1e18)

    logits_sum = jnp.zeros((tq, tk), jnp.float32) if with_attn else None

    # Static per-head loop (nH small); online-softmax state is per head in VMEM scratch.
    # TODO(synk): if dk/dv are not 128-multiples the lane-offset slices below imply masked
    # loads; pad head blocks to 128 lanes in prepare_mha_params if that ever dominates.
    for h in range(num_heads):
        qh = q_all[:, h * dk:(h + 1) * dk]                                # [tq, dk]
        kh = k_all[:, h * dk:(h + 1) * dk]                                # [tk, dk]
        vh = v_all[:, h * dv:(h + 1) * dv]                                # [tk, dv]
        logits = jax.lax.dot_general(qh, kh, (((1,), (1,)), ((), ())),
                                     preferred_element_type=jnp.float32)  # [tq, tk]
        logits = jnp.where(masked, neg, logits)                           # masked_fill
        if with_attn:
            logits_sum = logits_sum + logits
        # flash-style online softmax (f32): EUP exp, state carried across key tiles
        m_prev = m_scr[h]                                                 # [tq, 1]
        m_new = jnp.maximum(m_prev, jnp.max(logits, axis=-1, keepdims=True))
        alpha = jnp.exp(m_prev - m_new)
        p = jnp.exp(logits - m_new)
        l_scr[h] = alpha * l_scr[h] + jnp.sum(p, axis=-1, keepdims=True)
        acc_scr[h] = alpha * acc_scr[h] + jnp.dot(p, vh,
                                                  preferred_element_type=jnp.float32)
        m_scr[h] = m_new
        # TODO(synk): attention dropout omitted (p=0.0 / inference => identity).

    if with_attn:
        attn_ref[0] = logits_sum * (1.0 / num_heads)   # mean of masked logits (module spec)

    # ---- last key tile: normalize and fold heads straight into the output projection ----
    @pl.when(ki == nk - 1)
    def _():
        out_acc = jnp.zeros((tq, wo_ref.shape[1]), jnp.float32)
        for h in range(num_heads):
            inv = pl.reciprocal(l_scr[h], approx=True)                    # EUP reciprocal
            ctx_h = (acc_scr[h] * inv).astype(jnp.bfloat16)               # [tq, dv]
            out_acc = out_acc + jnp.dot(ctx_h, wo_ref[h * dv:(h + 1) * dv, :],
                                        preferred_element_type=jnp.float32)
        out_ref[0] = out_acc


# ----------------------------- one-time parameter prep -----------------------------

def prepare_mha_params(wq, wk, wv, wo, num_heads):
    """One-time prep (NOT per forward): fold the 1/sqrt(dk) query scale into wq and cast
    all projection weights to bf16 (MXU-native operands, half the weight DMA).
    TODO(synk): on v7x an fp8 weight variant would halve weight DMA again."""
    dk = wq.shape[1] // num_heads
    scale = float(dk) ** -0.5
    return dict(wq=(wq * scale).astype(jnp.bfloat16),
                wk=wk.astype(jnp.bfloat16),
                wv=wv.astype(jnp.bfloat16),
                wo=wo.astype(jnp.bfloat16))


# ----------------------------- wrapper -----------------------------

def multi_head_attention(queries, keys, values, key_valid_len, params, num_heads,
                         return_attention_weights=True, q_tile=256, k_tile=512):
    """queries [B,Sq,H]; keys/values [B,Sk,H]; key_valid_len int32 [B] — key positions
    >= key_valid_len[b] are masked (the module's key-padding mask, True = masked);
    params from prepare_mha_params.  Returns (outputs [B,Sq,Dout], attn [B,Sq,Sk] | None).
    TODO(synk): arbitrary (non key-padding) masks would need a compact int8 mask input."""
    B, Sq, H = queries.shape
    Sk = keys.shape[1]
    wq, wk, wv, wo = params["wq"], params["wk"], params["wv"], params["wo"]
    Dk, Dv, Dout = wq.shape[1], wv.shape[1], wo.shape[1]
    dk, dv = Dk // num_heads, Dv // num_heads

    tq = Sq if Sq <= q_tile else q_tile       # full dim, or a multiple of 8
    tk = Sk if Sk <= k_tile else k_tile       # full dim, or a multiple of 128
    nq, nk = pl.cdiv(Sq, tq), pl.cdiv(Sk, tk)

    if key_valid_len is None:
        key_valid_len = jnp.full((B,), Sk, jnp.int32)
    key_valid_len = key_valid_len.astype(jnp.int32)

    out_shape = [jax.ShapeDtypeStruct((B, Sq, Dout), jnp.float32)]
    out_specs = [pl.BlockSpec((1, tq, Dout), lambda b, qi, ki, kl: (b, qi, 0))]
    if return_attention_weights:
        out_shape.append(jax.ShapeDtypeStruct((B, Sq, Sk), jnp.float32))
        out_specs.append(pl.BlockSpec((1, tq, tk), lambda b, qi, ki, kl: (b, qi, ki)))

    kernel = functools.partial(_mha_kernel, num_heads=num_heads, dk=dk, dv=dv,
                               with_attn=return_attention_weights)

    grid_spec = pltpu.PrefetchScalarGridSpec(
        num_scalar_prefetch=1,
        grid=(B, nq, nk),
        in_specs=[
            pl.BlockSpec((1, tq, H), lambda b, qi, ki, kl: (b, qi, 0)),   # queries
            pl.BlockSpec((1, tk, H), lambda b, qi, ki, kl: (b, ki, 0)),   # keys
            pl.BlockSpec((1, tk, H), lambda b, qi, ki, kl: (b, ki, 0)),   # values
            pl.BlockSpec((H, Dk),    lambda b, qi, ki, kl: (0, 0)),       # wq (scaled, bf16)
            pl.BlockSpec((H, Dk),    lambda b, qi, ki, kl: (0, 0)),       # wk
            pl.BlockSpec((H, Dv),    lambda b, qi, ki, kl: (0, 0)),       # wv
            pl.BlockSpec((Dv, Dout), lambda b, qi, ki, kl: (0, 0)),       # wo
        ],
        out_specs=tuple(out_specs),
        scratch_shapes=[
            pltpu.VMEM((tq, Dk), jnp.float32),               # cached Q projection
            pltpu.VMEM((num_heads, tq, 1), jnp.float32),     # running max  (per head)
            pltpu.VMEM((num_heads, tq, 1), jnp.float32),     # running sum  (per head)
            pltpu.VMEM((num_heads, tq, dv), jnp.float32),    # running ctx  (per head)
        ],
    )

    results = pl.pallas_call(
        kernel,
        out_shape=tuple(out_shape),
        grid_spec=grid_spec,
        compiler_params=pltpu.CompilerParams(
            dimension_semantics=("parallel", "parallel", "arbitrary")),
    )(key_valid_len, queries, keys, values, wq, wk, wv, wo)

    if return_attention_weights:
        return results
    return results[0], None


# ----------------------------- pure-JAX reference -----------------------------

def _ref_mha(queries, keys, values, mask, params, num_heads):
    """Mirrors MultiHeadAttention.forward using the same prepared (bf16, pre-scaled)
    weights so parity checks isolate kernel-side numerics."""
    wq, wk, wv, wo = params["wq"], params["wk"], params["wv"], params["wo"]
    dk = wq.shape[1] // num_heads
    dv = wv.shape[1] // num_heads
    hi = jax.lax.Precision.HIGHEST

    q = jnp.dot(queries.astype(jnp.bfloat16), wq, preferred_element_type=jnp.float32)
    k = jnp.dot(keys.astype(jnp.bfloat16), wk, preferred_element_type=jnp.float32)
    v = jnp.dot(values.astype(jnp.bfloat16), wv, preferred_element_type=jnp.float32)

    B, Sq, _ = q.shape

    def split(x, d):
        return x.reshape(B, x.shape[1], num_heads, d).transpose(0, 2, 1, 3)  # [B,nH,S,d]

    qh, kh, vh = split(q, dk), split(k, dk), split(v, dv)
    logits = jnp.einsum('bnqd,bnkd->bnqk', qh, kh, precision=hi)
    if mask is not None:
        logits = jnp.where(mask[:, None].astype(bool), -1e18, logits)
    attn = logits.sum(1) / num_heads
    w = jax.nn.softmax(logits, axis=-1)
    ctx = jnp.einsum('bnqk,bnkd->bnqd', w, vh, precision=hi)
    ctx = ctx.transpose(0, 2, 1, 3).reshape(B, Sq, -1)                        # merge_heads
    out = jnp.dot(ctx.astype(jnp.bfloat16), wo, preferred_element_type=jnp.float32)
    return out, attn


# ----------------------------- main -----------------------------

if __name__ == "__main__":
    key = jax.random.PRNGKey(0)
    ks = jax.random.split(key, 8)

    def rnd(k, shape, s=1.0):
        return jax.random.normal(k, shape, jnp.float32) * s

    # ---- small shapes consistent with the module ----
    B, Sq, Sk = 2, 8, 8
    H, Dk, Dv, Dout, nH = 32, 32, 32, 32, 4

    # torch nn.Linear weight [out,in] acts as x @ W.T; stored pre-transposed as [in,out].
    wq = rnd(ks[0], (H, Dk), 0.1)
    wk = rnd(ks[1], (H, Dk), 0.1)
    wv = rnd(ks[2], (H, Dv), 0.1)
    wo = rnd(ks[3], (Dv, Dout), 0.1)
    params = prepare_mha_params(wq, wk, wv, wo, nH)      # one-time: bf16 + scale folding

    queries = rnd(ks[4], (B, Sq, H))
    memory = rnd(ks[5], (B, Sk, H))                      # keys == values source
    valid = jnp.array([Sk, Sk - 3], jnp.int32)           # per-batch valid key length
    mask = jnp.arange(Sk)[None, None, :] >= valid[:, None, None]   # [B,1,Sk], True = masked

    out, attn = multi_head_attention(queries, memory, memory, valid, params, nH)
    jax.block_until_ready((out, attn))

    out_ref, attn_ref = _ref_mha(queries, memory, memory, mask, params, nH)
    assert jnp.allclose(out, out_ref, rtol=5e-3, atol=5e-3), \
        float(jnp.max(jnp.abs(out - out_ref)))
    assert jnp.allclose(attn, attn_ref, rtol=5e-3, atol=5e-3)

    # fast path: caller discards attention weights -> no [B,Sq,Sk] output buffer / stores
    out2, _ = multi_head_attention(queries, memory, memory, valid, params, nH,
                                   return_attention_weights=False)
    jax.block_until_ready(out2)
    assert jnp.allclose(out2, out, rtol=1e-6, atol=1e-6)

    # ---- exercise the tiled path (multiple Sq tiles + online-softmax Sk tiles) ----
    B2, S2 = 2, 256
    q2 = rnd(ks[6], (B2, S2, H))
    m2 = rnd(ks[7], (B2, S2, H))
    valid2 = jnp.array([S2, S2 - 37], jnp.int32)
    mask2 = jnp.arange(S2)[None, None, :] >= valid2[:, None, None]
    out_t, attn_t = multi_head_attention(q2, m2, m2, valid2, params, nH,
                                         q_tile=128, k_tile=128)
    jax.block_until_ready((out_t, attn_t))
    out_tr, attn_tr = _ref_mha(q2, m2, m2, mask2, params, nH)
    assert jnp.allclose(out_t, out_tr, rtol=5e-3, atol=5e-3), \
        float(jnp.max(jnp.abs(out_t - out_tr)))
    assert jnp.allclose(attn_t, attn_tr, rtol=5e-3, atol=5e-3)

    print("KERNEL_OK")
</pallas_src>

<mosaic_0001>
module attributes {stable_mosaic.version = 11 : i64} {
  func.func @_mha_kernel(%arg0: i32, %arg1: i32, %arg2: i32, %arg3: memref<2xi32, #tpu.memory_space<smem>>, %arg4: memref<1x8x32xf32, #tpu.memory_space<vmem>>, %arg5: memref<1x8x32xf32, #tpu.memory_space<vmem>>, %arg6: memref<1x8x32xf32, #tpu.memory_space<vmem>>, %arg7: memref<32x32xbf16, #tpu.memory_space<vmem>>, %arg8: memref<32x32xbf16, #tpu.memory_space<vmem>>, %arg9: memref<32x32xbf16, #tpu.memory_space<vmem>>, %arg10: memref<32x32xbf16, #tpu.memory_space<vmem>>, %arg11: memref<1x8x32xf32, #tpu.memory_space<vmem>>, %arg12: memref<1x8x8xf32, #tpu.memory_space<vmem>>, %arg13: memref<8x32xf32, #tpu.memory_space<vmem>>, %arg14: memref<4x8x1xf32, #tpu.memory_space<vmem>>, %arg15: memref<4x8x1xf32, #tpu.memory_space<vmem>>, %arg16: memref<4x8x8xf32, #tpu.memory_space<vmem>>) attributes {dimension_semantics = [#tpu.dimension_semantics<parallel>, #tpu.dimension_semantics<parallel>, #tpu.dimension_semantics<arbitrary>], iteration_bounds = array<i64: 2, 1, 1>, scalar_prefetch = 1 : i64, scratch_operands = 4 : i64, tpu.core_type = #tpu.core_type<tc>, window_params = [{transform_indices = @transform_0, window_bounds = array<i64: 1, 8, 32>}, {transform_indices = @transform_1, window_bounds = array<i64: 1, 8, 32>}, {transform_indices = @transform_2, window_bounds = array<i64: 1, 8, 32>}, {pipeline_mode = #tpu.pipeline_mode<synchronous>, transform_indices = @transform_3, window_bounds = array<i64: 32, 32>}, {pipeline_mode = #tpu.pipeline_mode<synchronous>, transform_indices = @transform_4, window_bounds = array<i64: 32, 32>}, {pipeline_mode = #tpu.pipeline_mode<synchronous>, transform_indices = @transform_5, window_bounds = array<i64: 32, 32>}, {pipeline_mode = #tpu.pipeline_mode<synchronous>, transform_indices = @transform_6, window_bounds = array<i64: 32, 32>}, {transform_indices = @transform_7, window_bounds = array<i64: 1, 8, 32>}, {transform_indices = @transform_8, window_bounds = array<i64: 1, 8, 8>}]} {
    %c0_i32 = arith.constant 0 : i32
    %0 = arith.cmpi eq, %arg2, %c0_i32 : i32
    %1 = arith.extui %0 : i1 to i32
    %c0_i32_0 = arith.constant 0 : i32
    %2 = arith.cmpi ne, %1, %c0_i32_0 : i32
    scf.if %2 {
      %c0_109 = arith.constant 0 : index
      %c0_110 = arith.constant 0 : index
      %c0_111 = arith.constant 0 : index
      %183 = vector.load %arg4[%c0_109, %c0_110, %c0_111] : memref<1x8x32xf32, #tpu.memory_space<vmem>>, vector<1x8x32xf32>
      %184 = vector.shape_cast %183 : vector<1x8x32xf32> to vector<8x32xf32>
      %185 = arith.truncf %184 : vector<8x32xf32> to vector<8x32xbf16>
      %c0_112 = arith.constant 0 : index
      %c0_113 = arith.constant 0 : index
      %186 = vector.load %arg7[%c0_112, %c0_113] : memref<32x32xbf16, #tpu.memory_space<vmem>>, vector<32x32xbf16>
      %cst_114 = arith.constant dense<0.000000e+00> : vector<8x32xf32>
      %187 = tpu.matmul %185, %186, %cst_114 {dimension_numbers = #tpu.dot_dimension_numbers<[1], [0], [0], [1], [0, 0, 1, 1], [], []>} : vector<8x32xbf16>, vector<32x32xbf16>, vector<8x32xf32> -> vector<8x32xf32>
      %c0_115 = arith.constant 0 : index
      %c0_116 = arith.constant 0 : index
      %188 = vector.load %arg13[%c0_115, %c0_116] : memref<8x32xf32, #tpu.memory_space<vmem>>, vector<8x32xf32>
      tpu.vector_store %arg13[%c0_115, %c0_116], %187 {strides = array<i32>} : memref<8x32xf32, #tpu.memory_space<vmem>>, vector<8x32xf32>,
      %cst_117 = arith.constant 0xFF800000 : f32
      %189 = vector.broadcast %cst_117 : f32 to vector<4x8x1xf32>
      %c0_118 = arith.constant 0 : index
      %c0_119 = arith.constant 0 : index
      %c0_120 = arith.constant 0 : index
      %190 = vector.load %arg14[%c0_118, %c0_119, %c0_120] : memref<4x8x1xf32, #tpu.memory_space<vmem>>, vector<4x8x1xf32>
      tpu.vector_store %arg14[%c0_118, %c0_119, %c0_120], %189 {strides = array<i32>} : memref<4x8x1xf32, #tpu.memory_space<vmem>>, vector<4x8x1xf32>,
      %cst_121 = arith.constant 0.000000e+00 : f32
      %191 = vector.broadcast %cst_121 : f32 to vector<4x8x1xf32>
      %c0_122 = arith.constant 0 : index
      %c0_123 = arith.constant 0 : index
      %c0_124 = arith.constant 0 : index
      %192 = vector.load %arg15[%c0_122, %c0_123, %c0_124] : memref<4x8x1xf32, #tpu.memory_space<vmem>>, vector<4x8x1xf32>
      tpu.vector_store %arg15[%c0_122, %c0_123, %c0_124], %191 {strides = array<i32>} : memref<4x8x1xf32, #tpu.memory_space<vmem>>, vector<4x8x1xf32>,
      %cst_125 = arith.constant 0.000000e+00 : f32
      %193 = vector.broadcast %cst_125 : f32 to vector<4x8x8xf32>
      %c0_126 = arith.constant 0 : index
      %c0_127 = arith.constant 0 : index
      %c0_128 = arith.constant 0 : index
      %194 = vector.load %arg16[%c0_126, %c0_127, %c0_128] : memref<4x8x8xf32, #tpu.memory_space<vmem>>, vector<4x8x8xf32>
      tpu.vector_store %arg16[%c0_126, %c0_127, %c0_128], %193 {strides = array<i32>} : memref<4x8x8xf32, #tpu.memory_space<vmem>>, vector<4x8x8xf32>,
    } else {
    }
    %c0 = arith.constant 0 : index
    %c0_1 = arith.constant 0 : index
    %c0_2 = arith.constant 0 : index
    %3 = vector.load %arg5[%c0, %c0_1, %c0_2] : memref<1x8x32xf32, #tpu.memory_space<vmem>>, vector<1x8x32xf32>
    %4 = vector.shape_cast %3 : vector<1x8x32xf32> to vector<8x32xf32>
    %5 = arith.truncf %4 : vector<8x32xf32> to vector<8x32xbf16>
    %c0_3 = arith.constant 0 : index
    %c0_4 = arith.constant 0 : index
    %6 = vector.load %arg8[%c0_3, %c0_4] : memref<32x32xbf16, #tpu.memory_space<vmem>>, vector<32x32xbf16>
    %cst = arith.constant dense<0.000000e+00> : vector<8x32xf32>
    %7 = tpu.matmul %5, %6, %cst {dimension_numbers = #tpu.dot_dimension_numbers<[1], [0], [0], [1], [0, 0, 1, 1], [], []>} : vector<8x32xbf16>, vector<32x32xbf16>, vector<8x32xf32> -> vector<8x32xf32>
    %c0_5 = arith.constant 0 : index
    %c0_6 = arith.constant 0 : index
    %c0_7 = arith.constant 0 : index
    %8 = vector.load %arg6[%c0_5, %c0_6, %c0_7] : memref<1x8x32xf32, #tpu.memory_space<vmem>>, vector<1x8x32xf32>
    %9 = vector.shape_cast %8 : vector<1x8x32xf32> to vector<8x32xf32>
    %10 = arith.truncf %9 : vector<8x32xf32> to vector<8x32xbf16>
    %c0_8 = arith.constant 0 : index
    %c0_9 = arith.constant 0 : index
    %11 = vector.load %arg9[%c0_8, %c0_9] : memref<32x32xbf16, #tpu.memory_space<vmem>>, vector<32x32xbf16>
    %cst_10 = arith.constant dense<0.000000e+00> : vector<8x32xf32>
    %12 = tpu.matmul %10, %11, %cst_10 {dimension_numbers = #tpu.dot_dimension_numbers<[1], [0], [0], [1], [0, 0, 1, 1], [], []>} : vector<8x32xbf16>, vector<32x32xbf16>, vector<8x32xf32> -> vector<8x32xf32>
    %c0_11 = arith.constant 0 : index
    %c0_12 = arith.constant 0 : index
    %13 = vector.load %arg13[%c0_11, %c0_12] : memref<8x32xf32, #tpu.memory_space<vmem>>, vector<8x32xf32>
    %14 = arith.index_cast %arg0 : i32 to index
    %15 = memref.load %arg3[%14] : memref<2xi32, #tpu.memory_space<smem>>
    %c8_i32 = arith.constant 8 : i32
    %16 = arith.muli %arg2, %c8_i32 : i32
    %17 = tpu.iota {dimensions = array<i32: 1>} : vector<8x8xi32>
    %18 = vector.broadcast %16 : i32 to vector<8x8xi32>
    %19 = arith.addi %18, %17 : vector<8x8xi32>
    %20 = vector.broadcast %15 : i32 to vector<8x8xi32>
    %21 = arith.cmpi sge, %19, %20 : vector<8x8xi32>
    %cst_13 = arith.constant 0.000000e+00 : f32
    %22 = vector.broadcast %cst_13 : f32 to vector<8x8xf32>
    %23 = vector.extract_strided_slice %13 {offsets = [0, 0], sizes = [8, 8], strides = [1, 1]} : vector<8x32xf32> to vector<8x8xf32>
    %24 = vector.extract_strided_slice %7 {offsets = [0, 0], sizes = [8, 8], strides = [1, 1]} : vector<8x32xf32> to vector<8x8xf32>
    %25 = vector.extract_strided_slice %12 {offsets = [0, 0], sizes = [8, 8], strides = [1, 1]} : vector<8x32xf32> to vector<8x8xf32>
    %cst_14 = arith.constant dense<0.000000e+00> : vector<8x8xf32>
    %26 = tpu.matmul %23, %24, %cst_14 {dimension_numbers = #tpu.dot_dimension_numbers<[1], [1], [0], [0], [0, 0, 1, 0], [], []>} : vector<8x8xf32>, vector<8x8xf32>, vector<8x8xf32> -> vector<8x8xf32>
    %cst_15 = arith.constant -9.99999984E+17 : f32
    %27 = vector.broadcast %cst_15 : f32 to vector<8x8xf32>
    %28 = arith.select %21, %27, %26 : vector<8x8xi1>, vector<8x8xf32>
    %29 = arith.addf %22, %28 : vector<8x8xf32>
    %c0_16 = arith.constant 0 : index
    %c0_17 = arith.constant 0 : index
    %c0_18 = arith.constant 0 : index
    %30 = vector.load %arg14[%c0_16, %c0_17, %c0_18] : memref<4x8x1xf32, #tpu.memory_space<vmem>>, vector<1x8x1xf32>
    %31 = vector.shape_cast %30 : vector<1x8x1xf32> to vector<8x1xf32>
    %cst_19 = arith.constant dense<0xFF800000> : vector<8xf32>
    %32 = vector.multi_reduction <maximumf>, %28, %cst_19 [1] : vector<8x8xf32> to vector<8xf32>
    %33 = vector.shape_cast %32 : vector<8xf32> to vector<8x1xf32>
    %34 = arith.maximumf %31, %33 : vector<8x1xf32>
    %35 = arith.subf %31, %34 : vector<8x1xf32>
    %36 = math.exp %35 : vector<8x1xf32>
    %37 = vector.broadcast %34 : vector<8x1xf32> to vector<8x8xf32>
    %38 = arith.subf %28, %37 : vector<8x8xf32>
    %39 = math.exp %38 : vector<8x8xf32>
    %c0_20 = arith.constant 0 : index
    %c0_21 = arith.constant 0 : index
    %c0_22 = arith.constant 0 : index
    %40 = vector.load %arg15[%c0_20, %c0_21, %c0_22] : memref<4x8x1xf32, #tpu.memory_space<vmem>>, vector<1x8x1xf32>
    %41 = vector.shape_cast %40 : vector<1x8x1xf32> to vector<8x1xf32>
    %42 = arith.mulf %36, %41 : vector<8x1xf32>
    %cst_23 = arith.constant dense<0.000000e+00> : vector<8xf32>
    %43 = vector.multi_reduction <add>, %39, %cst_23 [1] : vector<8x8xf32> to vector<8xf32>
    %44 = vector.shape_cast %43 : vector<8xf32> to vector<8x1xf32>
    %45 = arith.addf %42, %44 : vector<8x1xf32>
    %c0_24 = arith.constant 0 : index
    %c0_25 = arith.constant 0 : index
    %c0_26 = arith.constant 0 : index
    %46 = vector.load %arg15[%c0_24, %c0_25, %c0_26] : memref<4x8x1xf32, #tpu.memory_space<vmem>>, vector<1x8x1xf32>
    %47 = vector.shape_cast %46 : vector<1x8x1xf32> to vector<8x1xf32>
    %48 = vector.shape_cast %45 : vector<8x1xf32> to vector<1x8x1xf32>
    tpu.vector_store %arg15[%c0_24, %c0_25, %c0_26], %48 {strides = array<i32>} : memref<4x8x1xf32, #tpu.memory_space<vmem>>, vector<1x8x1xf32>,
    %c0_27 = arith.constant 0 : index
    %c0_28 = arith.constant 0 : index
    %c0_29 = arith.constant 0 : index
    %49 = vector.load %arg16[%c0_27, %c0_28, %c0_29] : memref<4x8x8xf32, #tpu.memory_space<vmem>>, vector<1x8x8xf32>
    %50 = vector.shape_cast %49 : vector<1x8x8xf32> to vector<8x8xf32>
    %51 = vector.broadcast %36 : vector<8x1xf32> to vector<8x8xf32>
    %52 = arith.mulf %51, %50 : vector<8x8xf32>
    %cst_30 = arith.constant dense<0.000000e+00> : vector<8x8xf32>
    %53 = tpu.matmul %39, %25, %cst_30 {dimension_numbers = #tpu.dot_dimension_numbers<[1], [0], [0], [1], [0, 0, 1, 1], [], []>} : vector<8x8xf32>, vector<8x8xf32>, vector<8x8xf32> -> vector<8x8xf32>
    %54 = arith.addf %52, %53 : vector<8x8xf32>
    %c0_31 = arith.constant 0 : index
    %c0_32 = arith.constant 0 : index
    %c0_33 = arith.constant 0 : index
    %55 = vector.load %arg16[%c0_31, %c0_32, %c0_33] : memref<4x8x8xf32, #tpu.memory_space<vmem>>, vector<1x8x8xf32>
    %56 = vector.shape_cast %55 : vector<1x8x8xf32> to vector<8x8xf32>
    %57 = vector.shape_cast %54 : vector<8x8xf32> to vector<1x8x8xf32>
    tpu.vector_store %arg16[%c0_31, %c0_32, %c0_33], %57 {strides = array<i32>} : memref<4x8x8xf32, #tpu.memory_space<vmem>>, vector<1x8x8xf32>,
    %c0_34 = arith.constant 0 : index
    %c0_35 = arith.constant 0 : index
    %c0_36 = arith.constant 0 : index
    %58 = vector.load %arg14[%c0_34, %c0_35, %c0_36] : memref<4x8x1xf32, #tpu.memory_space<vmem>>, vector<1x8x1xf32>
    %59 = vector.shape_cast %58 : vector<1x8x1xf32> to vector<8x1xf32>
    %60 = vector.shape_cast %34 : vector<8x1xf32> to vector<1x8x1xf32>
    tpu.vector_store %arg14[%c0_34, %c0_35, %c0_36], %60 {strides = array<i32>} : memref<4x8x1xf32, #tpu.memory_space<vmem>>, vector<1x8x1xf32>,
    %61 = vector.extract_strided_slice %13 {offsets = [0, 8], sizes = [8, 8], strides = [1, 1]} : vector<8x32xf32> to vector<8x8xf32>
    %62 = vector.extract_strided_slice %7 {offsets = [0, 8], sizes = [8, 8], strides = [1, 1]} : vector<8x32xf32> to vector<8x8xf32>
    %63 = vector.extract_strided_slice %12 {offsets = [0, 8], sizes = [8, 8], strides = [1, 1]} : vector<8x32xf32> to vector<8x8xf32>
    %cst_37 = arith.constant dense<0.000000e+00> : vector<8x8xf32>
    %64 = tpu.matmul %61, %62, %cst_37 {dimension_numbers = #tpu.dot_dimension_numbers<[1], [1], [0], [0], [0, 0, 1, 0], [], []>} : vector<8x8xf32>, vector<8x8xf32>, vector<8x8xf32> -> vector<8x8xf32>
    %cst_38 = arith.constant -9.99999984E+17 : f32
    %65 = vector.broadcast %cst_38 : f32 to vector<8x8xf32>
    %66 = arith.select %21, %65, %64 : vector<8x8xi1>, vector<8x8xf32>
    %67 = arith.addf %29, %66 : vector<8x8xf32>
    %c1 = arith.constant 1 : index
    %c0_39 = arith.constant 0 : index
    %c0_40 = arith.constant 0 : index
    %68 = vector.load %arg14[%c1, %c0_39, %c0_40] : memref<4x8x1xf32, #tpu.memory_space<vmem>>, vector<1x8x1xf32>
    %69 = vector.shape_cast %68 : vector<1x8x1xf32> to vector<8x1xf32>
    %cst_41 = arith.constant dense<0xFF800000> : vector<8xf32>
    %70 = vector.multi_reduction <maximumf>, %66, %cst_41 [1] : vector<8x8xf32> to vector<8xf32>
    %71 = vector.shape_cast %70 : vector<8xf32> to vector<8x1xf32>
    %72 = arith.maximumf %69, %71 : vector<8x1xf32>
    %73 = arith.subf %69, %72 : vector<8x1xf32>
    %74 = math.exp %73 : vector<8x1xf32>
    %75 = vector.broadcast %72 : vector<8x1xf32> to vector<8x8xf32>
    %76 = arith.subf %66, %75 : vector<8x8xf32>
    %77 = math.exp %76 : vector<8x8xf32>
    %c1_42 = arith.constant 1 : index
    %c0_43 = arith.constant 0 : index
    %c0_44 = arith.constant 0 : index
    %78 = vector.load %arg15[%c1_42, %c0_43, %c0_44] : memref<4x8x1xf32, #tpu.memory_space<vmem>>, vector<1x8x1xf32>
    %79 = vector.shape_cast %78 : vector<1x8x1xf32> to vector<8x1xf32>
    %80 = arith.mulf %74, %79 : vector<8x1xf32>
    %cst_45 = arith.constant dense<0.000000e+00> : vector<8xf32>
    %81 = vector.multi_reduction <add>, %77, %cst_45 [1] : vector<8x8xf32> to vector<8xf32>
    %82 = vector.shape_cast %81 : vector<8xf32> to vector<8x1xf32>
    %83 = arith.addf %80, %82 : vector<8x1xf32>
    %c1_46 = arith.constant 1 : index
    %c0_47 = arith.constant 0 : index
    %c0_48 = arith.constant 0 : index
    %84 = vector.load %arg15[%c1_46, %c0_47, %c0_48] : memref<4x8x1xf32, #tpu.memory_space<vmem>>, vector<1x8x1xf32>
    %85 = vector.shape_cast %84 : vector<1x8x1xf32> to vector<8x1xf32>
    %86 = vector.shape_cast %83 : vector<8x1xf32> to vector<1x8x1xf32>
    tpu.vector_store %arg15[%c1_46, %c0_47, %c0_48], %86 {strides = array<i32>} : memref<4x8x1xf32, #tpu.memory_space<vmem>>, vector<1x8x1xf32>,
    %c1_49 = arith.constant 1 : index
    %c0_50 = arith.constant 0 : index
    %c0_51 = arith.constant 0 : index
    %87 = vector.load %arg16[%c1_49, %c0_50, %c0_51] : memref<4x8x8xf32, #tpu.memory_space<vmem>>, vector<1x8x8xf32>
    %88 = vector.shape_cast %87 : vector<1x8x8xf32> to vector<8x8xf32>
    %89 = vector.broadcast %74 : vector<8x1xf32> to vector<8x8xf32>
    %90 = arith.mulf %89, %88 : vector<8x8xf32>
    %cst_52 = arith.constant dense<0.000000e+00> : vector<8x8xf32>
    %91 = tpu.matmul %77, %63, %cst_52 {dimension_numbers = #tpu.dot_dimension_numbers<[1], [0], [0], [1], [0, 0, 1, 1], [], []>} : vector<8x8xf32>, vector<8x8xf32>, vector<8x8xf32> -> vector<8x8xf32>
    %92 = arith.addf %90, %91 : vector<8x8xf32>
    %c1_53 = arith.constant 1 : index
    %c0_54 = arith.constant 0 : index
    %c0_55 = arith.constant 0 : index
    %93 = vector.load %arg16[%c1_53, %c0_54, %c0_55] : memref<4x8x8xf32, #tpu.memory_space<vmem>>, vector<1x8x8xf32>
    %94 = vector.shape_cast %93 : vector<1x8x8xf32> to vector<8x8xf32>
    %95 = vector.shape_cast %92 : vector<8x8xf32> to vector<1x8x8xf32>
    tpu.vector_store %arg16[%c1_53, %c0_54, %c0_55], %95 {strides = array<i32>} : memref<4x8x8xf32, #tpu.memory_space<vmem>>, vector<1x8x8xf32>,
    %c1_56 = arith.constant 1 : index
    %c0_57 = arith.constant 0 : index
    %c0_58 = arith.constant 0 : index
    %96 = vector.load %arg14[%c1_56, %c0_57, %c0_58] : memref<4x8x1xf32, #tpu.memory_space<vmem>>, vector<1x8x1xf32>
    %97 = vector.shape_cast %96 : vector<1x8x1xf32> to vector<8x1xf32>
    %98 = vector.shape_cast %72 : vector<8x1xf32> to vector<1x8x1xf32>
    tpu.vector_store %arg14[%c1_56, %c0_57, %c0_58], %98 {strides = array<i32>} : memref<4x8x1xf32, #tpu.memory_space<vmem>>, vector<1x8x1xf32>,
    %99 = vector.extract_strided_slice %13 {offsets = [0, 16], sizes = [8, 8], strides = [1, 1]} : vector<8x32xf32> to vector<8x8xf32>
    %100 = vector.extract_strided_slice %7 {offsets = [0, 16], sizes = [8, 8], strides = [1, 1]} : vector<8x32xf32> to vector<8x8xf32>
    %101 = vector.extract_strided_slice %12 {offsets = [0, 16], sizes = [8, 8], strides = [1, 1]} : vector<8x32xf32> to vector<8x8xf32>
    %cst_59 = arith.constant dense<0.000000e+00> : vector<8x8xf32>
    %102 = tpu.matmul %99, %100, %cst_59 {dimension_numbers = #tpu.dot_dimension_numbers<[1], [1], [0], [0], [0, 0, 1, 0], [], []>} : vector<8x8xf32>, vector<8x8xf32>, vector<8x8xf32> -> vector<8x8xf32>
    %cst_60 = arith.constant -9.99999984E+17 : f32
    %103 = vector.broadcast %cst_60 : f32 to vector<8x8xf32>
    %104 = arith.select %21, %103, %102 : vector<8x8xi1>, vector<8x8xf32>
    %105 = arith.addf %67, %104 : vector<8x8xf32>
    %c2 = arith.constant 2 : index
    %c0_61 = arith.constant 0 : index
    %c0_62 = arith.constant 0 : index
    %106 = vector.load %arg14[%c2, %c0_61, %c0_62] : memref<4x8x1xf32, #tpu.memory_space<vmem>>, vector<1x8x1xf32>
    %107 = vector.shape_cast %106 : vector<1x8x1xf32> to vector<8x1xf32>
    %cst_63 = arith.constant dense<0xFF800000> : vector<8xf32>
    %108 = vector.multi_reduction <maximumf>, %104, %cst_63 [1] : vector<8x8xf32> to vector<8xf32>
    %109 = vector.shape_cast %108 : vector<8xf32> to vector<8x1xf32>
    %110 = arith.maximumf %107, %109 : vector<8x1xf32>
    %111 = arith.subf %107, %110 : vector<8x1xf32>
    %112 = math.exp %111 : vector<8x1xf32>
    %113 = vector.broadcast %110 : vector<8x1xf32> to vector<8x8xf32>
    %114 = arith.subf %104, %113 : vector<8x8xf32>
    %115 = math.exp %114 : vector<8x8xf32>
    %c2_64 = arith.constant 2 : index
    %c0_65 = arith.constant 0 : index
    %c0_66 = arith.constant 0 : index
    %116 = vector.load %arg15[%c2_64, %c0_65, %c0_66] : memref<4x8x1xf32, #tpu.memory_space<vmem>>, vector<1x8x1xf32>
    %117 = vector.shape_cast %116 : vector<1x8x1xf32> to vector<8x1xf32>
    %118 = arith.mulf %112, %117 : vector<8x1xf32>
    %cst_67 = arith.constant dense<0.000000e+00> : vector<8xf32>
    %119 = vector.multi_reduction <add>, %115, %cst_67 [1] : vector<8x8xf32> to vector<8xf32>
    %120 = vector.shape_cast %119 : vector<8xf32> to vector<8x1xf32>
    %121 = arith.addf %118, %120 : vector<8x1xf32>
    %c2_68 = arith.constant 2 : index
    %c0_69 = arith.constant 0 : index
    %c0_70 = arith.constant 0 : index
    %122 = vector.load %arg15[%c2_68, %c0_69, %c0_70] : memref<4x8x1xf32, #tpu.memory_space<vmem>>, vector<1x8x1xf32>
    %123 = vector.shape_cast %122 : vector<1x8x1xf32> to vector<8x1xf32>
    %124 = vector.shape_cast %121 : vector<8x1xf32> to vector<1x8x1xf32>
    tpu.vector_store %arg15[%c2_68, %c0_69, %c0_70], %124 {strides = array<i32>} : memref<4x8x1xf32, #tpu.memory_space<vmem>>, vector<1x8x1xf32>,
    %c2_71 = arith.constant 2 : index
    %c0_72 = arith.constant 0 : index
    %c0_73 = arith.constant 0 : index
    %125 = vector.load %arg16[%c2_71, %c0_72, %c0_73] : memref<4x8x8xf32, #tpu.memory_space<vmem>>, vector<1x8x8xf32>
    %126 = vector.shape_cast %125 : vector<1x8x8xf32> to vector<8x8xf32>
    %127 = vector.broadcast %112 : vector<8x1xf32> to vector<8x8xf32>
    %128 = arith.mulf %127, %126 : vector<8x8xf32>
    %cst_74 = arith.constant dense<0.000000e+00> : vector<8x8xf32>
    %129 = tpu.matmul %115, %101, %cst_74 {dimension_numbers = #tpu.dot_dimension_numbers<[1], [0], [0], [1], [0, 0, 1, 1], [], []>} : vector<8x8xf32>, vector<8x8xf32>, vector<8x8xf32> -> vector<8x8xf32>
    %130 = arith.addf %128, %129 : vector<8x8xf32>
    %c2_75 = arith.constant 2 : index
    %c0_76 = arith.constant 0 : index
    %c0_77 = arith.constant 0 : index
    %131 = vector.load %arg16[%c2_75, %c0_76, %c0_77] : memref<4x8x8xf32, #tpu.memory_space<vmem>>, vector<1x8x8xf32>
    %132 = vector.shape_cast %131 : vector<1x8x8xf32> to vector<8x8xf32>
    %133 = vector.shape_cast %130 : vector<8x8xf32> to vector<1x8x8xf32>
    tpu.vector_store %arg16[%c2_75, %c0_76, %c0_77], %133 {strides = array<i32>} : memref<4x8x8xf32, #tpu.memory_space<vmem>>, vector<1x8x8xf32>,
    %c2_78 = arith.constant 2 : index
    %c0_79 = arith.constant 0 : index
    %c0_80 = arith.constant 0 : index
    %134 = vector.load %arg14[%c2_78, %c0_79, %c0_80] : memref<4x8x1xf32, #tpu.memory_space<vmem>>, vector<1x8x1xf32>
    %135 = vector.shape_cast %134 : vector<1x8x1xf32> to vector<8x1xf32>
    %136 = vector.shape_cast %110 : vector<8x1xf32> to vector<1x8x1xf32>
    tpu.vector_store %arg14[%c2_78, %c0_79, %c0_80], %136 {strides = array<i32>} : memref<4x8x1xf32, #tpu.memory_space<vmem>>, vector<1x8x1xf32>,
    %137 = vector.extract_strided_slice %13 {offsets = [0, 24], sizes = [8, 8], strides = [1, 1]} : vector<8x32xf32> to vector<8x8xf32>
    %138 = vector.extract_strided_slice %7 {offsets = [0, 24], sizes = [8, 8], strides = [1, 1]} : vector<8x32xf32> to vector<8x8xf32>
    %139 = vector.extract_strided_slice %12 {offsets = [0, 24], sizes = [8, 8], strides = [1, 1]} : vector<8x32xf32> to vector<8x8xf32>
    %cst_81 = arith.constant dense<0.000000e+00> : vector<8x8xf32>
    %140 = tpu.matmul %137, %138, %cst_81 {dimension_numbers = #tpu.dot_dimension_numbers<[1], [1], [0], [0], [0, 0, 1, 0], [], []>} : vector<8x8xf32>, vector<8x8xf32>, vector<8x8xf32> -> vector<8x8xf32>
    %cst_82 = arith.constant -9.99999984E+17 : f32
    %141 = vector.broadcast %cst_82 : f32 to vector<8x8xf32>
    %142 = arith.select %21, %141, %140 : vector<8x8xi1>, vector<8x8xf32>
    %143 = arith.addf %105, %142 : vector<8x8xf32>
    %c3 = arith.constant 3 : index
    %c0_83 = arith.constant 0 : index
    %c0_84 = arith.constant 0 : index
    %144 = vector.load %arg14[%c3, %c0_83, %c0_84] : memref<4x8x1xf32, #tpu.memory_space<vmem>>, vector<1x8x1xf32>
    %145 = vector.shape_cast %144 : vector<1x8x1xf32> to vector<8x1xf32>
    %cst_85 = arith.constant dense<0xFF800000> : vector<8xf32>
    %146 = vector.multi_reduction <maximumf>, %142, %cst_85 [1] : vector<8x8xf32> to vector<8xf32>
    %147 = vector.shape_cast %146 : vector<8xf32> to vector<8x1xf32>
    %148 = arith.maximumf %145, %147 : vector<8x1xf32>
    %149 = arith.subf %145, %148 : vector<8x1xf32>
    %150 = math.exp %149 : vector<8x1xf32>
    %151 = vector.broadcast %148 : vector<8x1xf32> to vector<8x8xf32>
    %152 = arith.subf %142, %151 : vector<8x8xf32>
    %153 = math.exp %152 : vector<8x8xf32>
    %c3_86 = arith.constant 3 : index
    %c0_87 = arith.constant 0 : index
    %c0_88 = arith.constant 0 : index
    %154 = vector.load %arg15[%c3_86, %c0_87, %c0_88] : memref<4x8x1xf32, #tpu.memory_space<vmem>>, vector<1x8x1xf32>
    %155 = vector.shape_cast %154 : vector<1x8x1xf32> to vector<8x1xf32>
    %156 = arith.mulf %150, %155 : vector<8x1xf32>
    %cst_89 = arith.constant dense<0.000000e+00> : vector<8xf32>
    %157 = vector.multi_reduction <add>, %153, %cst_89 [1] : vector<8x8xf32> to vector<8xf32>
    %158 = vector.shape_cast %157 : vector<8xf32> to vector<8x1xf32>
    %159 = arith.addf %156, %158 : vector<8x1xf32>
    %c3_90 = arith.constant 3 : index
    %c0_91 = arith.constant 0 : index
    %c0_92 = arith.constant 0 : index
    %160 = vector.load %arg15[%c3_90, %c0_91, %c0_92] : memref<4x8x1xf32, #tpu.memory_space<vmem>>, vector<1x8x1xf32>
    %161 = vector.shape_cast %160 : vector<1x8x1xf32> to vector<8x1xf32>
    %162 = vector.shape_cast %159 : vector<8x1xf32> to vector<1x8x1xf32>
    tpu.vector_store %arg15[%c3_90, %c0_91, %c0_92], %162 {strides = array<i32>} : memref<4x8x1xf32, #tpu.memory_space<vmem>>, vector<1x8x1xf32>,
    %c3_93 = arith.constant 3 : index
    %c0_94 = arith.constant 0 : index
    %c0_95 = arith.constant 0 : index
    %163 = vector.load %arg16[%c3_93, %c0_94, %c0_95] : memref<4x8x8xf32, #tpu.memory_space<vmem>>, vector<1x8x8xf32>
    %164 = vector.shape_cast %163 : vector<1x8x8xf32> to vector<8x8xf32>
    %165 = vector.broadcast %150 : vector<8x1xf32> to vector<8x8xf32>
    %166 = arith.mulf %165, %164 : vector<8x8xf32>
    %cst_96 = arith.constant dense<0.000000e+00> : vector<8x8xf32>
    %167 = tpu.matmul %153, %139, %cst_96 {dimension_numbers = #tpu.dot_dimension_numbers<[1], [0], [0], [1], [0, 0, 1, 1], [], []>} : vector<8x8xf32>, vector<8x8xf32>, vector<8x8xf32> -> vector<8x8xf32>
    %168 = arith.addf %166, %167 : vector<8x8xf32>
    %c3_97 = arith.constant 3 : index
    %c0_98 = arith.constant 0 : index
    %c0_99 = arith.constant 0 : index
    %169 = vector.load %arg16[%c3_97, %c0_98, %c0_99] : memref<4x8x8xf32, #tpu.memory_space<vmem>>, vector<1x8x8xf32>
    %170 = vector.shape_cast %169 : vector<1x8x8xf32> to vector<8x8xf32>
    %171 = vector.shape_cast %168 : vector<8x8xf32> to vector<1x8x8xf32>
    tpu.vector_store %arg16[%c3_97, %c0_98, %c0_99], %171 {strides = array<i32>} : memref<4x8x8xf32, #tpu.memory_space<vmem>>, vector<1x8x8xf32>,
    %c3_100 = arith.constant 3 : index
    %c0_101 = arith.constant 0 : index
    %c0_102 = arith.constant 0 : index
    %172 = vector.load %arg14[%c3_100, %c0_101, %c0_102] : memref<4x8x1xf32, #tpu.memory_space<vmem>>, vector<1x8x1xf32>
    %173 = vector.shape_cast %172 : vector<1x8x1xf32> to vector<8x1xf32>
    %174 = vector.shape_cast %148 : vector<8x1xf32> to vector<1x8x1xf32>
    tpu.vector_store %arg14[%c3_100, %c0_101, %c0_102], %174 {strides = array<i32>} : memref<4x8x1xf32, #tpu.memory_space<vmem>>, vector<1x8x1xf32>,
    %cst_103 = arith.constant 2.500000e-01 : f32
    %175 = vector.broadcast %cst_103 : f32 to vector<8x8xf32>
    %176 = arith.mulf %143, %175 : vector<8x8xf32>
    %c0_104 = arith.constant 0 : index
    %c0_105 = arith.constant 0 : index
    %c0_106 = arith.constant 0 : index
    %177 = vector.load %arg12[%c0_104, %c0_105, %c0_106] : memref<1x8x8xf32, #tpu.memory_space<vmem>>, vector<1x8x8xf32>
    %178 = vector.shape_cast %177 : vector<1x8x8xf32> to vector<8x8xf32>
    %179 = vector.shape_cast %176 : vector<8x8xf32> to vector<1x8x8xf32>
    tpu.vector_store %arg12[%c0_104, %c0_105, %c0_106], %179 {strides = array<i32>} : memref<1x8x8xf32, #tpu.memory_space<vmem>>, vector<1x8x8xf32>,
    %c0_i32_107 = arith.constant 0 : i32
    %180 = arith.cmpi eq, %arg2, %c0_i32_107 : i32
    %181 = arith.extui %180 : i1 to i32
    %c0_i32_108 = arith.constant 0 : i32
    %182 = arith.cmpi ne, %181, %c0_i32_108 : i32
    scf.if %182 {
      %cst_109 = arith.constant 0.000000e+00 : f32
      %183 = vector.broadcast %cst_109 : f32 to vector<8x32xf32>
      %c0_110 = arith.constant 0 : index
      %c0_111 = arith.constant 0 : index
      %c0_112 = arith.constant 0 : index
      %184 = vector.load %arg15[%c0_110, %c0_111, %c0_112] : memref<4x8x1xf32, #tpu.memory_space<vmem>>, vector<1x8x1xf32>
      %185 = vector.shape_cast %184 : vector<1x8x1xf32> to vector<8x1xf32>
      %186 = tpu.reciprocal %185 {approx = true} : vector<8x1xf32> -> vector<8x1xf32>
      %c0_113 = arith.constant 0 : index
      %c0_114 = arith.constant 0 : index
      %c0_115 = arith.constant 0 : index
      %187 = vector.load %arg16[%c0_113, %c0_114, %c0_115] : memref<4x8x8xf32, #tpu.memory_space<vmem>>, vector<1x8x8xf32>
      %188 = vector.shape_cast %187 : vector<1x8x8xf32> to vector<8x8xf32>
      %189 = vector.broadcast %186 : vector<8x1xf32> to vector<8x8xf32>
      %190 = arith.mulf %188, %189 : vector<8x8xf32>
      %191 = arith.truncf %190 : vector<8x8xf32> to vector<8x8xbf16>
      %c0_116 = arith.constant 0 : index
      %c0_117 = arith.constant 0 : index
      %192 = vector.load %arg10[%c0_116, %c0_117] : memref<32x32xbf16, #tpu.memory_space<vmem>>, vector<8x32xbf16>
      %cst_118 = arith.constant dense<0.000000e+00> : vector<8x32xf32>
      %193 = tpu.matmul %191, %192, %cst_118 {dimension_numbers = #tpu.dot_dimension_numbers<[1], [0], [0], [1], [0, 0, 1, 1], [], []>} : vector<8x8xbf16>, vector<8x32xbf16>, vector<8x32xf32> -> vector<8x32xf32>
      %194 = arith.addf %183, %193 : vector<8x32xf32>
      %c1_119 = arith.constant 1 : index
      %c0_120 = arith.constant 0 : index
      %c0_121 = arith.constant 0 : index
      %195 = vector.load %arg15[%c1_119, %c0_120, %c0_121] : memref<4x8x1xf32, #tpu.memory_space<vmem>>, vector<1x8x1xf32>
      %196 = vector.shape_cast %195 : vector<1x8x1xf32> to vector<8x1xf32>
      %197 = tpu.reciprocal %196 {approx = true} : vector<8x1xf32> -> vector<8x1xf32>
      %c1_122 = arith.constant 1 : index
      %c0_123 = arith.constant 0 : index
      %c0_124 = arith.constant 0 : index
      %198 = vector.load %arg16[%c1_122, %c0_123, %c0_124] : memref<4x8x8xf32, #tpu.memory_space<vmem>>, vector<1x8x8xf32>
      %199 = vector.shape_cast %198 : vector<1x8x8xf32> to vector<8x8xf32>
      %200 = vector.broadcast %197 : vector<8x1xf32> to vector<8x8xf32>
      %201 = arith.mulf %199, %200 : vector<8x8xf32>
      %202 = arith.truncf %201 : vector<8x8xf32> to vector<8x8xbf16>
      %c8 = arith.constant 8 : index
      %c0_125 = arith.constant 0 : index
      %203 = vector.load %arg10[%c8, %c0_125] : memref<32x32xbf16, #tpu.memory_space<vmem>>, vector<8x32xbf16>
      %cst_126 = arith.constant dense<0.000000e+00> : vector<8x32xf32>
      %204 = tpu.matmul %202, %203, %cst_126 {dimension_numbers = #tpu.dot_dimension_numbers<[1], [0], [0], [1], [0, 0, 1, 1], [], []>} : vector<8x8xbf16>, vector<8x32xbf16>, vector<8x32xf32> -> vector<8x32xf32>
      %205 = arith.addf %194, %204 : vector<8x32xf32>
      %c2_127 = arith.constant 2 : index
      %c0_128 = arith.constant 0 : index
      %c0_129 = arith.constant 0 : index
      %206 = vector.load %arg15[%c2_127, %c0_128, %c0_129] : memref<4x8x1xf32, #tpu.memory_space<vmem>>, vector<1x8x1xf32>
      %207 = vector.shape_cast %206 : vector<1x8x1xf32> to vector<8x1xf32>
      %208 = tpu.reciprocal %207 {approx = true} : vector<8x1xf32> -> vector<8x1xf32>
      %c2_130 = arith.constant 2 : index
      %c0_131 = arith.constant 0 : index
      %c0_132 = arith.constant 0 : index
      %209 = vector.load %arg16[%c2_130, %c0_131, %c0_132] : memref<4x8x8xf32, #tpu.memory_space<vmem>>, vector<1x8x8xf32>
      %210 = vector.shape_cast %209 : vector<1x8x8xf32> to vector<8x8xf32>
      %211 = vector.broadcast %208 : vector<8x1xf32> to vector<8x8xf32>
      %212 = arith.mulf %210, %211 : vector<8x8xf32>
      %213 = arith.truncf %212 : vector<8x8xf32> to vector<8x8xbf16>
      %c16 = arith.constant 16 : index
      %c0_133 = arith.constant 0 : index
      %214 = vector.load %arg10[%c16, %c0_133] : memref<32x32xbf16, #tpu.memory_space<vmem>>, vector<8x32xbf16>
      %cst_134 = arith.constant dense<0.000000e+00> : vector<8x32xf32>
      %215 = tpu.matmul %213, %214, %cst_134 {dimension_numbers = #tpu.dot_dimension_numbers<[1], [0], [0], [1], [0, 0, 1, 1], [], []>} : vector<8x8xbf16>, vector<8x32xbf16>, vector<8x32xf32> -> vector<8x32xf32>
      %216 = arith.addf %205, %215 : vector<8x32xf32>
      %c3_135 = arith.constant 3 : index
      %c0_136 = arith.constant 0 : index
      %c0_137 = arith.constant 0 : index
      %217 = vector.load %arg15[%c3_135, %c0_136, %c0_137] : memref<4x8x1xf32, #tpu.memory_space<vmem>>, vector<1x8x1xf32>
      %218 = vector.shape_cast %217 : vector<1x8x1xf32> to vector<8x1xf32>
      %219 = tpu.reciprocal %218 {approx = true} : vector<8x1xf32> -> vector<8x1xf32>
      %c3_138 = arith.constant 3 : index
      %c0_139 = arith.constant 0 : index
      %c0_140 = arith.constant 0 : index
      %220 = vector.load %arg16[%c3_138, %c0_139, %c0_140] : memref<4x8x8xf32, #tpu.memory_space<vmem>>, vector<1x8x8xf32>
      %221 = vector.shape_cast %220 : vector<1x8x8xf32> to vector<8x8xf32>
      %222 = vector.broadcast %219 : vector<8x1xf32> to vector<8x8xf32>
      %223 = arith.mulf %221, %222 : vector<8x8xf32>
      %224 = arith.truncf %223 : vector<8x8xf32> to vector<8x8xbf16>
      %c24 = arith.constant 24 : index
      %c0_141 = arith.constant 0 : index
      %225 = vector.load %arg10[%c24, %c0_141] : memref<32x32xbf16, #tpu.memory_space<vmem>>, vector<8x32xbf16>
      %cst_142 = arith.constant dense<0.000000e+00> : vector<8x32xf32>
      %226 = tpu.matmul %224, %225, %cst_142 {dimension_numbers = #tpu.dot_dimension_numbers<[1], [0], [0], [1], [0, 0, 1, 1], [], []>} : vector<8x8xbf16>, vector<8x32xbf16>, vector<8x32xf32> -> vector<8x32xf32>
      %227 = arith.addf %216, %226 : vector<8x32xf32>
      %c0_143 = arith.constant 0 : index
      %c0_144 = arith.constant 0 : index
      %c0_145 = arith.constant 0 : index
      %228 = vector.load %arg11[%c0_143, %c0_144, %c0_145] : memref<1x8x32xf32, #tpu.memory_space<vmem>>, vector<1x8x32xf32>
      %229 = vector.shape_cast %228 : vector<1x8x32xf32> to vector<8x32xf32>
      %230 = vector.shape_cast %227 : vector<8x32xf32> to vector<1x8x32xf32>
      tpu.vector_store %arg11[%c0_143, %c0_144, %c0_145], %230 {strides = array<i32>} : memref<1x8x32xf32, #tpu.memory_space<vmem>>, vector<1x8x32xf32>,
    } else {
    }
    return
  }
  func.func @transform_0(%arg0: i32, %arg1: i32, %arg2: i32, %arg3: memref<2xi32, #tpu.memory_space<smem>>) -> (i32, i32, i32) {
    %c0_i32 = arith.constant 0 : i32
    %c0_i32_0 = arith.constant 0 : i32
    return %arg0, %arg1, %c0_i32 : i32, i32, i32
  }
  func.func @transform_1(%arg0: i32, %arg1: i32, %arg2: i32, %arg3: memref<2xi32, #tpu.memory_space<smem>>) -> (i32, i32, i32) {
    %c0_i32 = arith.constant 0 : i32
    %c0_i32_0 = arith.constant 0 : i32
    return %arg0, %arg2, %c0_i32 : i32, i32, i32
  }
  func.func @transform_2(%arg0: i32, %arg1: i32, %arg2: i32, %arg3: memref<2xi32, #tpu.memory_space<smem>>) -> (i32, i32, i32) {
    %c0_i32 = arith.constant 0 : i32
    %c0_i32_0 = arith.constant 0 : i32
    return %arg0, %arg2, %c0_i32 : i32, i32, i32
  }
  func.func @transform_3(%arg0: i32, %arg1: i32, %arg2: i32, %arg3: memref<2xi32, #tpu.memory_space<smem>>) -> (i32, i32) {
    %c0_i32 = arith.constant 0 : i32
    %c0_i32_0 = arith.constant 0 : i32
    %c0_i32_1 = arith.constant 0 : i32
    return %c0_i32, %c0_i32_0 : i32, i32
  }
  func.func @transform_4(%arg0: i32, %arg1: i32, %arg2: i32, %arg3: memref<2xi32, #tpu.memory_space<smem>>) -> (i32, i32) {
    %c0_i32 = arith.constant 0 : i32
    %c0_i32_0 = arith.constant 0 : i32
    %c0_i32_1 = arith.constant 0 : i32
    return %c0_i32, %c0_i32_0 : i32, i32
  }
  func.func @transform_5(%arg0: i32, %arg1: i32, %arg2: i32, %arg3: memref<2xi32, #tpu.memory_space<smem>>) -> (i32, i32) {
    %c0_i32 = arith.constant 0 : i32
    %c0_i32_0 = arith.constant 0 : i32
    %c0_i32_1 = arith.constant 0 : i32
    return %c0_i32, %c0_i32_0 : i32, i32
  }
  func.func @transform_6(%arg0: i32, %arg1: i32, %arg2: i32, %arg3: memref<2xi32, #tpu.memory_space<smem>>) -> (i32, i32) {
    %c0_i32 = arith.constant 0 : i32
    %c0_i32_0 = arith.constant 0 : i32
    %c0_i32_1 = arith.constant 0 : i32
    return %c0_i32, %c0_i32_0 : i32, i32
  }
  func.func @transform_7(%arg0: i32, %arg1: i32, %arg2: i32, %arg3: memref<2xi32, #tpu.memory_space<smem>>) -> (i32, i32, i32) {
    %c0_i32 = arith.constant 0 : i32
    %c0_i32_0 = arith.constant 0 : i32
    return %arg0, %arg1, %c0_i32 : i32, i32, i32
  }
  func.func @transform_8(%arg0: i32, %arg1: i32, %arg2: i32, %arg3: memref<2xi32, #tpu.memory_space<smem>>) -> (i32, i32, i32) {
    %c0_i32 = arith.constant 0 : i32
    return %arg0, %arg1, %arg2 : i32, i32, i32
  }
}

</mosaic_0001>

<llo_original>
// kernel: tpu_custom_call.1
$region0: #{tpu_custom_call.1}
  #allocation0 [shape = 'u32[]', space=smem, size = 0x4, offset = 0x4, fixed_abs, tag = 'smem constant byte address 0x4 - core index']
  #allocation1 [shape = 'u32[144,128]{1,0:T(1,128)}', space=vmem, size = 0x12000, scoped, tag = 'internal scratch']
  #allocation2 [shape = 'f32[8,32]{1,0:T(8,128)}', space=vmem, size = 0x1000, scoped, tag = 'scratch operand']
  #allocation3 [shape = 'f32[4,8,1]{2,1,0:T(8,128)}', space=vmem, size = 0x4000, scoped, tag = 'scratch operand']
  #allocation4 [shape = 'f32[4,8,1]{2,1,0:T(8,128)}', space=vmem, size = 0x4000, scoped, tag = 'scratch operand']
  #allocation5 [shape = 'f32[4,8,8]{2,1,0:T(8,128)}', space=vmem, size = 0x4000, scoped, tag = 'scratch operand']
  #allocation6 [shape = 's32[1]{0}', space=sflag, size = 0x4, scoped, tag = 'scoped memory for tpu_custom_call.1']
  #allocation7 [shape = 'u8[512]{0}', space=smem, size = 0x200, scoped, tag = 'prefetched SMEM operand 0']
  %s0 = inlined_call_operand.hbm [shape: s32[2], index: 0, kind: input, shape index: {}]
  %s1 = inlined_call_operand.hbm [shape: f32[2,8,32], index: 1, kind: input, shape index: {}]
  %s2 = inlined_call_operand.hbm [shape: f32[2,8,32], index: 2, kind: input, shape index: {}]
  %s3 = inlined_call_operand.hbm [shape: f32[2,8,32], index: 3, kind: input, shape index: {}]
  %s4 = inlined_call_operand.hbm [shape: bf16[32,32], index: 4, kind: input, shape index: {}]
  %s5 = inlined_call_operand.vmem [shape: bf16[32,32], index: 5, kind: input, shape index: {}]
  %s6 = inlined_call_operand.hbm [shape: bf16[32,32], index: 6, kind: input, shape index: {}]
  %s7 = inlined_call_operand.hbm [shape: bf16[32,32], index: 7, kind: input, shape index: {}]
  %s8 = inlined_call_operand.hbm [shape: f32[2,8,32], index: 8, kind: output, shape index: {0}]
  %s9 = inlined_call_operand.hbm [shape: f32[2,8,8], index: 9, kind: output, shape index: {1}]
  %10 = xla_tuple %s8, %s9
  %s11 = sld [smem:[#allocation0]]
  $region101: #{tpu_custom_call.1} parent=0
    _
  %s13 = ssub.s32 1, %s11
  %s14 = scalar_select 0, %s13, %s11
  %16 = dma.hbm_to_smem %s0, 16, [#allocation7], [#allocation6]
  %17 = dma.done [#allocation6], 16
  %18 = sfence
  $region1: #{tpu_custom_call.1} parent=0
    #allocation8 [shape = 'u8[8192]{0}', space=vmem, size = 0x2000, scoped, tag = 'input window, operand 1']
    #allocation9 [shape = 's32[2]{0}', space=sflag, size = 0x8, scoped, tag = 'scoped memory for tpu_custom_call.1']
    #allocation10 [shape = 's32[2]{0}', space=sflag, size = 0x8, scoped, tag = 'scoped memory for tpu_custom_call.1']
    #allocation11 [shape = 'u8[8192]{0}', space=vmem, size = 0x2000, scoped, tag = 'input window, operand 2']
    #allocation12 [shape = 's32[2]{0}', space=sflag, size = 0x8, scoped, tag = 'scoped memory for tpu_custom_call.1']
    #allocation13 [shape = 'u8[8192]{0}', space=vmem, size = 0x2000, scoped, tag = 'input window, operand 3']
    #allocation14 [shape = 'u8[8192]{0}', space=vmem, size = 0x2000, scoped, tag = 'input window, operand 4, single buffered']
    #allocation15 [shape = 's32[1]{0}', space=sflag, size = 0x4, scoped, tag = 'scoped memory for tpu_custom_call.1']
    #allocation16 [shape = 'u8[8192]{0}', space=vmem, size = 0x2000, scoped, tag = 'input window, operand 6, single buffered']
    #allocation17 [shape = 'u8[8192]{0}', space=vmem, size = 0x2000, scoped, tag = 'input window, operand 7, single buffered']
    #allocation18 [shape = 's32[1]{0}', space=sflag, size = 0x4, scoped, tag = 'scoped memory for tpu_custom_call.1']
    #allocation19 [shape = 'u8[8192]{0}', space=vmem, size = 0x2000, scoped, tag = 'output window, operand 0']
    #allocation20 [shape = 'u8[8192]{0}', space=vmem, size = 0x2000, scoped, tag = 'output window, operand 1']
    #allocation21 [shape = 's32[2]{0}', space=sflag, size = 0x8, scoped, tag = 'scoped memory for tpu_custom_call.1']
    %19 = vsyncpa [#allocation9], 0
    %s20 = scalar_lea.sflag [#allocation9], 1
    %21 = vsyncpa %s20, 0
    %22 = vsyncpa [#allocation12], 0
    %s23 = scalar_lea.sflag [#allocation12], 1
    %24 = vsyncpa %s23, 0
    %25 = vsyncpa [#allocation15], 0
    %26 = vsyncpa [#allocation18], 0
    %27 = vsyncpa [#allocation10], 0
    %s28 = scalar_lea.sflag [#allocation10], 1
    %29 = vsyncpa %s28, 0
    %30 = vsyncpa [#allocation21], 0
    %s31 = scalar_lea.sflag [#allocation21], 1
    %32 = vsyncpa %s31, 0
    loop: start=0, step=1, limit=4
    $region2: #{tpu_custom_call.1} parent=1 // loop_pre_header
      _
    $region3: #{tpu_custom_call.1} parent=1 // loop_header
      %s34 = sphi 0, %s38
      %p35 = scmp.ge.s32.totalorder %s34, 4
      %s41 = sphi 0, %s60
      %s42 = sphi 0, %s56
      %s43 = sphi 0, %s52
      %s44 = sphi 0, %s41
      %s45 = sphi 0, %s42
      %s46 = sphi 0, %s43
      %s47 = sphi 0, %s44
      %s48 = sphi 0, %s45
      %s49 = sphi 0, %s46
      %s65 = sphi 0, %s67
      %s68 = sphi 0, %s65
      %s69 = sphi 0, %s68
      %s85 = sphi 0, %s69
      %s93 = sphi 0, %s95
      %s96 = sphi 0, %s93
      %s97 = sphi 0, %s96
      %s113 = sphi 0, %s97
      %s121 = sphi 0, %s123
      %s124 = sphi 0, %s121
      %s125 = sphi 0, %s124
      %s141 = sphi 0, %s125
      %s145 = sphi 0, %s145
      %s147 = sphi 0, %s145
      %s148 = sphi 0, %s147
      %s162 = sphi 0, %s148
      %s166 = sphi 0, %s166
      %s168 = sphi 0, %s166
      %s169 = sphi 0, %s168
      %s183 = sphi 0, %s169
      %s187 = sphi 0, %s187
      %s189 = sphi 0, %s187
      %s190 = sphi 0, %s189
      %s204 = sphi 0, %s190
      %s208 = sphi 0, %s208
      %s210 = sphi 0, %s208
      %s211 = sphi 0, %s210
      %s225 = sphi 0, %s211
      %s233 = sphi 0, %s235
      %s236 = sphi 0, %s233
      %s237 = sphi 0, %s236
      %s253 = sphi 0, %s237
      %s263 = sphi 0, %s265
      %s266 = sphi 0, %s263
      %s267 = sphi 0, %s266
      %s283 = sphi 0, %s267
    $region4: #{tpu_custom_call.1} parent=1 // loop_header_branch
      %37 = sbr.rel (%p35) target = $region8
    $region5: #{tpu_custom_call.1} parent=1 // loop_body
      %s39 = ssub.s32 %s34, 1
      %s40 = ssub.s32 %s34, 2
      %s50 = sadd.s32 1, %s43
      %p51 = scmp.ge.s32.totalorder %s50, 1
      %s52 = scalar_select %p51, 0, %s50
      %s53 = sadd.s32 1, %s42
      %s54 = scalar_select %p51, %s53, %s42
      %p55 = scmp.ge.s32.totalorder %s54, 1
      %s56 = scalar_select %p55, 0, %s54
      %s57 = sadd.s32 1, %s41
      %s58 = scalar_select %p55, %s57, %s41
      %p59 = scmp.ge.s32.totalorder %s58, 2
      %s60 = scalar_select %p59, 0, %s58
      %s61 = ssub.s32 %s41, %s60
      %s62 = ssub.s32 %s42, %s56
      %s63 = sor.u32 %s61, %s62
      %p64 = scmp.eq.s32.totalorder %s63, 0
      %s66 = sadd.s32 %s65, 1
      %s67 = scalar_select %p64, %s65, %s66
      %p70 = pneg %p64
      %p71 = scmp.eq.s32.totalorder %s34, 1
      %p72 = por %p70, %p71
      %p73 = scmp.ne.s32.totalorder %s65, %s68
      %p74 = scmp.eq.s32.totalorder %s34, 0
      %p75 = por %p73, %p74
      %p76 = scmp.ne.s32.totalorder %s65, %s68
      %p77 = scmp.eq.s32.totalorder %s39, 1
      %p78 = por %p76, %p77
      %p79 = scmp.ne.s32.totalorder %s68, %s69
      %p80 = scmp.eq.s32.totalorder %s39, 0
      %p81 = por %p79, %p80
      %p82 = scmp.ne.s32.totalorder %s68, %s69
      %p83 = scmp.eq.s32.totalorder %s40, 1
      %p84 = por %p82, %p83
      %p86 = scmp.ne.s32.totalorder %s69, %s85
      %p87 = scmp.eq.s32.totalorder %s40, 0
      %p88 = por %p86, %p87
      %s89 = ssub.s32 %s41, %s60
      %s90 = ssub.s32 %s43, %s52
      %s91 = sor.u32 %s89, %s90
      %p92 = scmp.eq.s32.totalorder %s91, 0
      %s94 = sadd.s32 %s93, 1
      %s95 = scalar_select %p92, %s93, %s94
      %p98 = pneg %p92
      %p99 = scmp.eq.s32.totalorder %s34, 1
      %p100 = por %p98, %p99
      %p101 = scmp.ne.s32.totalorder %s93, %s96
      %p102 = scmp.eq.s32.totalorder %s34, 0
      %p103 = por %p101, %p102
      %p104 = scmp.ne.s32.totalorder %s93, %s96
      %p105 = scmp.eq.s32.totalorder %s39, 1
      %p106 = por %p104, %p105
      %p107 = scmp.ne.s32.totalorder %s96, %s97
      %p108 = scmp.eq.s32.totalorder %s39, 0
      %p109 = por %p107, %p108
      %p110 = scmp.ne.s32.totalorder %s96, %s97
      %p111 = scmp.eq.s32.totalorder %s40, 1
      %p112 = por %p110, %p111
      %p114 = scmp.ne.s32.totalorder %s97, %s113
      %p115 = scmp.eq.s32.totalorder %s40, 0
      %p116 = por %p114, %p115
      %s117 = ssub.s32 %s41, %s60
      %s118 = ssub.s32 %s43, %s52
      %s119 = sor.u32 %s117, %s118
      %p120 = scmp.eq.s32.totalorder %s119, 0
      %s122 = sadd.s32 %s121, 1
      %s123 = scalar_select %p120, %s121, %s122
      %p126 = pneg %p120
      %p127 = scmp.eq.s32.totalorder %s34, 1
      %p128 = por %p126, %p127
      %p129 = scmp.ne.s32.totalorder %s121, %s124
      %p130 = scmp.eq.s32.totalorder %s34, 0
      %p131 = por %p129, %p130
      %p132 = scmp.ne.s32.totalorder %s121, %s124
      %p133 = scmp.eq.s32.totalorder %s39, 1
      %p134 = por %p132, %p133
      %p135 = scmp.ne.s32.totalorder %s124, %s125
      %p136 = scmp.eq.s32.totalorder %s39, 0
      %p137 = por %p135, %p136
      %p138 = scmp.ne.s32.totalorder %s124, %s125
      %p139 = scmp.eq.s32.totalorder %s40, 1
      %p140 = por %p138, %p139
      %p142 = scmp.ne.s32.totalorder %s125, %s141
      %p143 = scmp.eq.s32.totalorder %s40, 0
      %p144 = por %p142, %p143
      %s146 = sadd.s32 %s145, 1
      %p149 = scmp.eq.s32.totalorder %s34, 1
      %p150 = scmp.ne.s32.totalorder %s145, %s147
      %p151 = scmp.eq.s32.totalorder %s34, 0
      %p152 = por %p150, %p151
      %p153 = scmp.ne.s32.totalorder %s145, %s147
      %p154 = scmp.eq.s32.totalorder %s39, 1
      %p155 = por %p153, %p154
      %p156 = scmp.ne.s32.totalorder %s147, %s148
      %p157 = scmp.eq.s32.totalorder %s39, 0
      %p158 = por %p156, %p157
      %p159 = scmp.ne.s32.totalorder %s147, %s148
      %p160 = scmp.eq.s32.totalorder %s40, 1
      %p161 = por %p159, %p160
      %p163 = scmp.ne.s32.totalorder %s148, %s162
      %p164 = scmp.eq.s32.totalorder %s40, 0
      %p165 = por %p163, %p164
      %s167 = sadd.s32 %s166, 1
      %p170 = scmp.eq.s32.totalorder %s34, 1
      %p171 = scmp.ne.s32.totalorder %s166, %s168
      %p172 = scmp.eq.s32.totalorder %s34, 0
      %p173 = por %p171, %p172
      %p174 = scmp.ne.s32.totalorder %s166, %s168
      %p175 = scmp.eq.s32.totalorder %s39, 1
      %p176 = por %p174, %p175
      %p177 = scmp.ne.s32.totalorder %s168, %s169
      %p178 = scmp.eq.s32.totalorder %s39, 0
      %p179 = por %p177, %p178
      %p180 = scmp.ne.s32.totalorder %s168, %s169
      %p181 = scmp.eq.s32.totalorder %s40, 1
      %p182 = por %p180, %p181
      %p184 = scmp.ne.s32.totalorder %s169, %s183
      %p185 = scmp.eq.s32.totalorder %s40, 0
      %p186 = por %p184, %p185
      %s188 = sadd.s32 %s187, 1
      %p191 = scmp.eq.s32.totalorder %s34, 1
      %p192 = scmp.ne.s32.totalorder %s187, %s189
      %p193 = scmp.eq.s32.totalorder %s34, 0
      %p194 = por %p192, %p193
      %p195 = scmp.ne.s32.totalorder %s187, %s189
      %p196 = scmp.eq.s32.totalorder %s39, 1
      %p197 = por %p195, %p196
      %p198 = scmp.ne.s32.totalorder %s189, %s190
      %p199 = scmp.eq.s32.totalorder %s39, 0
      %p200 = por %p198, %p199
      %p201 = scmp.ne.s32.totalorder %s189, %s190
      %p202 = scmp.eq.s32.totalorder %s40, 1
      %p203 = por %p201, %p202
      %p205 = scmp.ne.s32.totalorder %s190, %s204
      %p206 = scmp.eq.s32.totalorder %s40, 0
      %p207 = por %p205, %p206
      %s209 = sadd.s32 %s208, 1
      %p212 = scmp.eq.s32.totalorder %s34, 1
      %p213 = scmp.ne.s32.totalorder %s208, %s210
      %p214 = scmp.eq.s32.totalorder %s34, 0
      %p215 = por %p213, %p214
      %p216 = scmp.ne.s32.totalorder %s208, %s210
      %p217 = scmp.eq.s32.totalorder %s39, 1
      %p218 = por %p216, %p217
      %p219 = scmp.ne.s32.totalorder %s210, %s211
      %p220 = scmp.eq.s32.totalorder %s39, 0
      %p221 = por %p219, %p220
      %p222 = scmp.ne.s32.totalorder %s210, %s211
      %p223 = scmp.eq.s32.totalorder %s40, 1
      %p224 = por %p222, %p223
      %p226 = scmp.ne.s32.totalorder %s211, %s225
      %p227 = scmp.eq.s32.totalorder %s40, 0
      %p228 = por %p226, %p227
      %s229 = ssub.s32 %s41, %s60
      %s230 = ssub.s32 %s42, %s56
      %s231 = sor.u32 %s229, %s230
      %p232 = scmp.eq.s32.totalorder %s231, 0
      %s234 = sadd.s32 %s233, 1
      %s235 = scalar_select %p232, %s233, %s234
      %p238 = pneg %p232
      %p239 = scmp.eq.s32.totalorder %s34, 1
      %p240 = por %p238, %p239
      %p241 = scmp.ne.s32.totalorder %s233, %s236
      %p242 = scmp.eq.s32.totalorder %s34, 0
      %p243 = por %p241, %p242
      %p244 = scmp.ne.s32.totalorder %s233, %s236
      %p245 = scmp.eq.s32.totalorder %s39, 1
      %p246 = por %p244, %p245
      %p247 = scmp.ne.s32.totalorder %s236, %s237
      %p248 = scmp.eq.s32.totalorder %s39, 0
      %p249 = por %p247, %p248
      %p250 = scmp.ne.s32.totalorder %s236, %s237
      %p251 = scmp.eq.s32.totalorder %s40, 1
      %p252 = por %p250, %p251
      %p254 = scmp.ne.s32.totalorder %s237, %s253
      %p255 = scmp.eq.s32.totalorder %s40, 0
      %p256 = por %p254, %p255
      %s257 = ssub.s32 %s41, %s60
      %s258 = ssub.s32 %s42, %s56
      %s259 = sor.u32 %s257, %s258
      %s260 = ssub.s32 %s43, %s52
      %s261 = sor.u32 %s259, %s260
      %p262 = scmp.eq.s32.totalorder %s261, 0
      %s264 = sadd.s32 %s263, 1
      %s265 = scalar_select %p262, %s263, %s264
      %p268 = pneg %p262
      %p269 = scmp.eq.s32.totalorder %s34, 1
      %p270 = por %p268, %p269
      %p271 = scmp.ne.s32.totalorder %s263, %s266
      %p272 = scmp.eq.s32.totalorder %s34, 0
      %p273 = por %p271, %p272
      %p274 = scmp.ne.s32.totalorder %s263, %s266
      %p275 = scmp.eq.s32.totalorder %s39, 1
      %p276 = por %p274, %p275
      %p277 = scmp.ne.s32.totalorder %s266, %s267
      %p278 = scmp.eq.s32.totalorder %s39, 0
      %p279 = por %p277, %p278
      %p280 = scmp.ne.s32.totalorder %s266, %s267
      %p281 = scmp.eq.s32.totalorder %s40, 1
      %p282 = por %p280, %p281
      %p284 = scmp.ne.s32.totalorder %s267, %s283
      %p285 = scmp.eq.s32.totalorder %s40, 0
      %p286 = por %p284, %p285
      %p287 = scmp.le.s32.totalorder 1, %s34
      %p288 = scmp.lt.s32.totalorder %s34, 3
      %p289 = pnand %p287, %p288
      %p290 = pneg %p289
      // Predicated region
      $region9: #{tpu_custom_call.1} parent=5 // pred_check
        _
      $region10: #{tpu_custom_call.1} parent=5 // pred_check_branch
        %292 = sbr.rel (%p289) target = $region12
      $region11: #{tpu_custom_call.1} parent=5 // pred_region
        %s293 = ssub.s32 %s34, 1
        // Predicated region
        $region13: #{tpu_custom_call.1} parent=11 // pred_check
          %p294 = pneg %p158
        $region14: #{tpu_custom_call.1} parent=11 // pred_check_branch
          %296 = sbr.rel (%p294) target = $region16
        $region15: #{tpu_custom_call.1} parent=11 // pred_region
          %s298 = ssub.s32 256, 256
          %299 = vsyncadd [#allocation15], %s298
          %s300 = sshll.u32 [#allocation14], 4
          %s301 = int_to_ptr.vmem [resolvable:$true] %s300
          %306 = dma.hbm_to_vmem [thread:$0]  %s4, 256, %s301, [#allocation15], 64, 64, 4
        $region16: #{tpu_custom_call.1} parent=11 // pred_fallthru
          _
        // Predicated region
        $region17: #{tpu_custom_call.1} parent=11 // pred_check
          %p307 = pneg %p179
        $region18: #{tpu_custom_call.1} parent=11 // pred_check_branch
          %309 = sbr.rel (%p307) target = $region20
        $region19: #{tpu_custom_call.1} parent=11 // pred_region
          _
        $region20: #{tpu_custom_call.1} parent=11 // pred_fallthru
          _
        // Predicated region
        $region21: #{tpu_custom_call.1} parent=11 // pred_check
          %p310 = pneg %p200
        $region22: #{tpu_custom_call.1} parent=11 // pred_check_branch
          %312 = sbr.rel (%p310) target = $region24
        $region23: #{tpu_custom_call.1} parent=11 // pred_region
          %s314 = ssub.s32 256, 256
          %315 = vsyncadd [#allocation15], %s314
          %s316 = sshll.u32 [#allocation16], 4
          %s317 = int_to_ptr.vmem [resolvable:$true] %s316
          %322 = dma.hbm_to_vmem [thread:$0]  %s6, 256, %s317, [#allocation15], 64, 64, 4
        $region24: #{tpu_custom_call.1} parent=11 // pred_fallthru
          _
        // Predicated region
        $region25: #{tpu_custom_call.1} parent=11 // pred_check
          %p323 = pneg %p221
        $region26: #{tpu_custom_call.1} parent=11 // pred_check_branch
          %325 = sbr.rel (%p323) target = $region28
        $region27: #{tpu_custom_call.1} parent=11 // pred_region
          %s327 = ssub.s32 256, 256
          %328 = vsyncadd [#allocation18], %s327
          %s329 = sshll.u32 [#allocation17], 4
          %s330 = int_to_ptr.vmem [resolvable:$true] %s329
          %335 = dma.hbm_to_vmem [thread:$0]  %s7, 256, %s330, [#allocation18], 64, 64, 4
        $region28: #{tpu_custom_call.1} parent=11 // pred_fallthru
          _
      $region12: #{tpu_custom_call.1} parent=5 // pred_fallthru
        _
      %p336 = scmp.lt.s32.totalorder %s34, 2
      // Predicated region
      $region29: #{tpu_custom_call.1} parent=5 // pred_check
        %p337 = pneg %p336
      $region30: #{tpu_custom_call.1} parent=5 // pred_check_branch
        %339 = sbr.rel (%p337) target = $region32
      $region31: #{tpu_custom_call.1} parent=5 // pred_region
        // Predicated region
        $region33: #{tpu_custom_call.1} parent=31 // pred_check
          %p340 = pneg %p75
        $region34: #{tpu_custom_call.1} parent=31 // pred_check_branch
          %342 = sbr.rel (%p340) target = $region36
        $region35: #{tpu_custom_call.1} parent=31 // pred_region
          %s343 = sand.u32 %s65, 1
          %s344 = scalar_lea.sflag [#allocation9], %s343
          %s345 = sand.u32 %s65, 1
          %s346 = smul.addr %s345, 8
          %s347 = scalar_lea.vmem [#allocation8], %s346
          %s349 = ssub.s32 128, 128
          %350 = vsyncadd %s344, %s349
          %s351 = sadd.s32 %s42, %s41
          %s352 = smul.addr %s351, 128
          %s353 = scalar_lea.hbm %s1, %s352
          %s355 = sshll.u32 %s347, 4
          %s356 = int_to_ptr.vmem [resolvable:$true] %s355
          %358 = dma.hbm_to_vmem [thread:$0]  %s353, 128, %s356, %s344
        $region36: #{tpu_custom_call.1} parent=31 // pred_fallthru
          _
        // Predicated region
        $region37: #{tpu_custom_call.1} parent=31 // pred_check
          %p359 = pneg %p103
        $region38: #{tpu_custom_call.1} parent=31 // pred_check_branch
          %361 = sbr.rel (%p359) target = $region40
        $region39: #{tpu_custom_call.1} parent=31 // pred_region
          %s362 = sand.u32 %s34, 1
          %s363 = scalar_lea.sflag [#allocation12], %s362
          %s364 = sand.u32 %s93, 1
          %s365 = smul.addr %s364, 8
          %s366 = scalar_lea.vmem [#allocation11], %s365
          %s368 = ssub.s32 128, 128
          %369 = vsyncadd %s363, %s368
          %s370 = sadd.s32 %s43, %s41
          %s371 = smul.addr %s370, 128
          %s372 = scalar_lea.hbm %s2, %s371
          %s374 = sshll.u32 %s366, 4
          %s375 = int_to_ptr.vmem [resolvable:$true] %s374
          %377 = dma.hbm_to_vmem [thread:$0]  %s372, 128, %s375, %s363
        $region40: #{tpu_custom_call.1} parent=31 // pred_fallthru
          _
        // Predicated region
        $region41: #{tpu_custom_call.1} parent=31 // pred_check
          %p378 = pneg %p131
        $region42: #{tpu_custom_call.1} parent=31 // pred_check_branch
          %380 = sbr.rel (%p378) target = $region44
        $region43: #{tpu_custom_call.1} parent=31 // pred_region
          %s381 = sand.u32 %s34, 1
          %s382 = scalar_lea.sflag [#allocation12], %s381
          %s383 = sand.u32 %s121, 1
          %s384 = smul.addr %s383, 8
          %s385 = scalar_lea.vmem [#allocation13], %s384
          %s387 = ssub.s32 128, 128
          %388 = vsyncadd %s382, %s387
          %s389 = sadd.s32 %s43, %s41
          %s390 = smul.addr %s389, 128
          %s391 = scalar_lea.hbm %s3, %s390
          %s393 = sshll.u32 %s385, 4
          %s394 = int_to_ptr.vmem [resolvable:$true] %s393
          %396 = dma.hbm_to_vmem [thread:$0]  %s391, 128, %s394, %s382
        $region44: #{tpu_custom_call.1} parent=31 // pred_fallthru
          _
      $region32: #{tpu_custom_call.1} parent=5 // pred_fallthru
        _
      %p397 = scmp.le.s32.totalorder 1, %s34
      %p398 = scmp.lt.s32.totalorder %s34, 3
      %p399 = pnand %p397, %p398
      %p400 = pneg %p399
      // Predicated region
      $region45: #{tpu_custom_call.1} parent=5 // pred_check
        _
      $region46: #{tpu_custom_call.1} parent=5 // pred_check_branch
        %402 = sbr.rel (%p399) target = $region48
      $region47: #{tpu_custom_call.1} parent=5 // pred_region
        %s403 = ssub.s32 %s34, 1
        %s404 = sand.u32 %s68, 1
        %s405 = scalar_lea.sflag [#allocation9], %s404
        %s406 = sand.u32 %s68, 1
        %s407 = smul.addr %s406, 8
        %s408 = scalar_lea.vmem [#allocation8], %s407
        // Predicated region
        $region49: #{tpu_custom_call.1} parent=47 // pred_check
          %p409 = pneg %p81
        $region50: #{tpu_custom_call.1} parent=47 // pred_check_branch
          %411 = sbr.rel (%p409) target = $region52
        $region51: #{tpu_custom_call.1} parent=47 // pred_region
          %412 = dma.done %s405, 128
        $region52: #{tpu_custom_call.1} parent=47 // pred_fallthru
          _
        %s413 = sand.u32 %s39, 1
        %s414 = scalar_lea.sflag [#allocation12], %s413
        %s415 = sand.u32 %s96, 1
        %s416 = smul.addr %s415, 8
        %s417 = scalar_lea.vmem [#allocation11], %s416
        // Predicated region
        $region53: #{tpu_custom_call.1} parent=47 // pred_check
          %p418 = pneg %p109
        $region54: #{tpu_custom_call.1} parent=47 // pred_check_branch
          %420 = sbr.rel (%p418) target = $region56
        $region55: #{tpu_custom_call.1} parent=47 // pred_region
          %421 = dma.done %s414, 128
        $region56: #{tpu_custom_call.1} parent=47 // pred_fallthru
          _
        %s422 = sand.u32 %s39, 1
        %s423 = scalar_lea.sflag [#allocation12], %s422
        %s424 = sand.u32 %s124, 1
        %s425 = smul.addr %s424, 8
        %s426 = scalar_lea.vmem [#allocation13], %s425
        // Predicated region
        $region57: #{tpu_custom_call.1} parent=47 // pred_check
          %p427 = pneg %p137
        $region58: #{tpu_custom_call.1} parent=47 // pred_check_branch
          %429 = sbr.rel (%p427) target = $region60
        $region59: #{tpu_custom_call.1} parent=47 // pred_region
          %430 = dma.done %s423, 128
        $region60: #{tpu_custom_call.1} parent=47 // pred_fallthru
          _
        // Predicated region
        $region61: #{tpu_custom_call.1} parent=47 // pred_check
          %p431 = pneg %p158
        $region62: #{tpu_custom_call.1} parent=47 // pred_check_branch
          %433 = sbr.rel (%p431) target = $region64
        $region63: #{tpu_custom_call.1} parent=47 // pred_region
          %434 = dma.done [#allocation15], 256
        $region64: #{tpu_custom_call.1} parent=47 // pred_fallthru
          _
        // Predicated region
        $region65: #{tpu_custom_call.1} parent=47 // pred_check
          %p435 = pneg %p200
        $region66: #{tpu_custom_call.1} parent=47 // pred_check_branch
          %437 = sbr.rel (%p435) target = $region68
        $region67: #{tpu_custom_call.1} parent=47 // pred_region
          %438 = dma.done [#allocation15], 256
        $region68: #{tpu_custom_call.1} parent=47 // pred_fallthru
          _
        // Predicated region
        $region69: #{tpu_custom_call.1} parent=47 // pred_check
          %p439 = pneg %p221
        $region70: #{tpu_custom_call.1} parent=47 // pred_check_branch
          %441 = sbr.rel (%p439) target = $region72
        $region71: #{tpu_custom_call.1} parent=47 // pred_region
          %442 = dma.done [#allocation18], 256
        $region72: #{tpu_custom_call.1} parent=47 // pred_fallthru
          _
        %s443 = sand.u32 %s68, 1
        %s444 = scalar_lea.sflag [#allocation9], %s443
        %s445 = sand.u32 %s68, 1
        %s446 = smul.addr %s445, 8
        %s447 = scalar_lea.vmem [#allocation8], %s446
        %p448 = pneg %p81
        %p449 = pneg %p78
        %s450 = sand.u32 %s39, 1
        %s451 = scalar_lea.sflag [#allocation12], %s450
        %s452 = sand.u32 %s96, 1
        %s453 = smul.addr %s452, 8
        %s454 = scalar_lea.vmem [#allocation11], %s453
        %p455 = pneg %p109
        %p456 = pneg %p106
        %s457 = sand.u32 %s39, 1
        %s458 = scalar_lea.sflag [#allocation12], %s457
        %s459 = sand.u32 %s124, 1
        %s460 = smul.addr %s459, 8
        %s461 = scalar_lea.vmem [#allocation13], %s460
        %p462 = pneg %p137
        %p463 = pneg %p134
        %p464 = pneg %p158
        %p465 = pneg %p155
        %p466 = pneg %p179
        %p467 = pneg %p176
        %p468 = pneg %p200
        %p469 = pneg %p197
        %p470 = pneg %p221
        %p471 = pneg %p218
        %p472 = pneg %p249
        %p473 = pneg %p246
        %s474 = sand.u32 %s236, 1
        %s475 = scalar_lea.sflag [#allocation10], %s474
        %s476 = sand.u32 %s236, 1
        %s477 = smul.addr %s476, 8
        %s478 = scalar_lea.vmem [#allocation19], %s477
        %p479 = pneg %p279
        %p480 = pneg %p276
        %s481 = sand.u32 %s266, 1
        %s482 = scalar_lea.sflag [#allocation21], %s481
        %s483 = sand.u32 %s266, 1
        %s484 = smul.addr %s483, 8
        %s485 = scalar_lea.vmem [#allocation20], %s484
        %p487 = scmp.eq.s32.totalorder %s46, 0
        // Predicated region
        $region73: #{tpu_custom_call.1} parent=47 // pred_check
          %p488 = pneg %p487
        $region74: #{tpu_custom_call.1} parent=47 // pred_check_branch
          %490 = sbr.rel (%p488) target = $region76
        $region75: #{tpu_custom_call.1} parent=47 // pred_region
          %v491 = vld [vmem:[%s408] sm:$0xff]
          %v492 = vpack.c.bf16 %v491, %v491
          %v493 = vld [vmem:[#allocation14] sm:$0xf]
          %v494 = vld [vmem:[#allocation14 + $0x4] sm:$0xf]
          %v495 = vld [vmem:[#allocation14 + $0x8] sm:$0xf]
          %v496 = vld [vmem:[#allocation14 + $0xc] sm:$0xf]
          %v501 = vunpack.c.l.b16 %v493
          %v502 = vunpack.c.l.b16 %v494
          %v503 = vunpack.c.l.b16 %v495
          %v504 = vunpack.c.l.b16 %v496
          %v505 = vpack.c.b16 %v502, %v501
          %v506 = vpack.c.b16 %v504, %v503
          %vm509 = vcmask 261120
          %v511 = vsel %vm509, %v492, 0
          %513 = vmatprep.subr.bf16.mxu0 0
          %514 = vmatpush1.bf16.msra.mxu0 %v505
          %515 = vmatprep.subr.bf16.mxu0 0
          %516 = vmatpush1.bf16.msra.mxu0 %v506
          %517 = vmatprep.subr.bf16.mxu0 0
          %518 = vmatpush1.bf16.msra.mxu0 0
          %519 = vmatprep.subr.bf16.mxu0 0
          %520 = vmatpush1.bf16.msra.mxu0 0
          %521 = vmatprep.subr.bf16.mxu0 0
          %522 = vmatpush1.bf16.msra.mxu0 0
          %523 = vmatprep.subr.bf16.mxu0 0
          %524 = vmatpush1.bf16.msra.mxu0 0
          %525 = vmatprep.subr.bf16.mxu0 0
          %526 = vmatpush1.bf16.msra.mxu0 0
          %527 = vmatprep.subr.bf16.mxu0 0
          %528 = vmatpush1.bf16.msra.mxu0 0
          %529 = vmatprep.subr.bf16.mxu0 0
          %530 = vmatpush1.bf16.msra.mxu0 0
          %531 = vmatprep.subr.bf16.mxu0 0
          %532 = vmatpush1.bf16.msra.mxu0 0
          %533 = vmatprep.subr.bf16.mxu0 0
          %534 = vmatpush1.bf16.msra.mxu0 0
          %535 = vmatprep.subr.bf16.mxu0 0
          %536 = vmatpush1.bf16.msra.mxu0 0
          %537 = vmatprep.subr.bf16.mxu0 0
          %538 = vmatpush1.bf16.msra.mxu0 0
          %539 = vmatprep.subr.bf16.mxu0 0
          %540 = vmatpush1.bf16.msra.mxu0 0
          %541 = vmatprep.subr.bf16.mxu0 0
          %542 = vmatpush1.bf16.msra.mxu0 0
          %543 = vmatprep.subr.bf16.mxu0 0
          %544 = vmatpush1.bf16.msra.mxu0 0
          %545 = vmatprep.mubr.bf16.mxu0 0
          %546 = vmatmul.mubr.bf16.gmra.mrb[0].mxu0 %v511
          %v547 = vpop.f32.mrb[0].mxu0
          %v548 = vadd.f32 0.0, %v547
          %v549 = vpop.f32.mrb[0].mxu0
          %v550 = vpop.f32.mrb[0].mxu0
          %v551 = vpop.f32.mrb[0].mxu0
          %552 = vdwg.mxu0
          %553 = vst.msk [vmem:[#allocation2] sm:$0xff] %vm509, %v548
          %vm554 = vcmask 7168
          %555 = vst.msk [vmem:[#allocation3] sm:$0xff] %vm554, -inf
          %556 = vst.msk [vmem:[#allocation3 + $0x8] sm:$0xff] %vm554, -inf
          %557 = vst.msk [vmem:[#allocation3 + $0x10] sm:$0xff] %vm554, -inf
          %558 = vst.msk [vmem:[#allocation3 + $0x18] sm:$0xff] %vm554, -inf
          %559 = vst.msk [vmem:[#allocation4] sm:$0xff] %vm554, 0.0
          %560 = vst.msk [vmem:[#allocation4 + $0x8] sm:$0xff] %vm554, 0.0
          %561 = vst.msk [vmem:[#allocation4 + $0x10] sm:$0xff] %vm554, 0.0
          %562 = vst.msk [vmem:[#allocation4 + $0x18] sm:$0xff] %vm554, 0.0
          %vm563 = vcmask 64512
          %564 = vst.msk [vmem:[#allocation5] sm:$0xff] %vm563, 0.0
          %565 = vst.msk [vmem:[#allocation5 + $0x8] sm:$0xff] %vm563, 0.0
          %566 = vst.msk [vmem:[#allocation5 + $0x10] sm:$0xff] %vm563, 0.0
          %567 = vst.msk [vmem:[#allocation5 + $0x18] sm:$0xff] %vm563, 0.0
        $region76: #{tpu_custom_call.1} parent=47 // pred_fallthru
          _
        %v568 = vld [vmem:[%s417] sm:$0xff]
        %v569 = vpack.c.bf16 %v568, %v568
        %v570 = vld [vmem:[%s5] sm:$0xf]
        %v571 = vld [vmem:[%s5 + $0x4] sm:$0xf]
        %v572 = vld [vmem:[%s5 + $0x8] sm:$0xf]
        %v573 = vld [vmem:[%s5 + $0xc] sm:$0xf]
        %v578 = vunpack.c.l.b16 %v570
        %v579 = vunpack.c.l.b16 %v571
        %v580 = vunpack.c.l.b16 %v572
        %v581 = vunpack.c.l.b16 %v573
        %v582 = vpack.c.b16 %v579, %v578
        %v583 = vpack.c.b16 %v581, %v580
        %vm586 = vcmask 261120
        %v588 = vsel %vm586, %v569, 0
        %590 = vmatprep.subr.bf16.mxu0 0
        %591 = vmatpush1.bf16.msra.mxu0 %v582
        %592 = vmatprep.subr.bf16.mxu0 0
        %593 = vmatpush1.bf16.msra.mxu0 %v583
        %594 = vmatprep.subr.bf16.mxu0 0
        %595 = vmatpush1.bf16.msra.mxu0 0
        %596 = vmatprep.subr.bf16.mxu0 0
        %597 = vmatpush1.bf16.msra.mxu0 0
        %598 = vmatprep.subr.bf16.mxu0 0
        %599 = vmatpush1.bf16.msra.mxu0 0
        %600 = vmatprep.subr.bf16.mxu0 0
        %601 = vmatpush1.bf16.msra.mxu0 0
        %602 = vmatprep.subr.bf16.mxu0 0
        %603 = vmatpush1.bf16.msra.mxu0 0
        %604 = vmatprep.subr.bf16.mxu0 0
        %605 = vmatpush1.bf16.msra.mxu0 0
        %606 = vmatprep.subr.bf16.mxu0 0
        %607 = vmatpush1.bf16.msra.mxu0 0
        %608 = vmatprep.subr.bf16.mxu0 0
        %609 = vmatpush1.bf16.msra.mxu0 0
        %610 = vmatprep.subr.bf16.mxu0 0
        %611 = vmatpush1.bf16.msra.mxu0 0
        %612 = vmatprep.subr.bf16.mxu0 0
        %613 = vmatpush1.bf16.msra.mxu0 0
        %614 = vmatprep.subr.bf16.mxu0 0
        %615 = vmatpush1.bf16.msra.mxu0 0
        %616 = vmatprep.subr.bf16.mxu0 0
        %617 = vmatpush1.bf16.msra.mxu0 0
        %618 = vmatprep.subr.bf16.mxu0 0
        %619 = vmatpush1.bf16.msra.mxu0 0
        %620 = vmatprep.subr.bf16.mxu0 0
        %621 = vmatpush1.bf16.msra.mxu0 0
        %622 = vmatprep.mubr.bf16.mxu0 0
        %623 = vmatmul.mubr.bf16.gmra.mrb[0].mxu0 %v588
        %v624 = vpop.f32.mrb[0].mxu0
        %v625 = vadd.f32 0.0, %v624
        %v626 = vpop.f32.mrb[0].mxu0
        %v627 = vpop.f32.mrb[0].mxu0
        %v628 = vpop.f32.mrb[0].mxu0
        %629 = vdwg.mxu0
        %v630 = vld [vmem:[%s426] sm:$0xff]
        %v631 = vpack.c.bf16 %v630, %v630
        %v632 = vld [vmem:[#allocation16] sm:$0xf]
        %v633 = vld [vmem:[#allocation16 + $0x4] sm:$0xf]
        %v634 = vld [vmem:[#allocation16 + $0x8] sm:$0xf]
        %v635 = vld [vmem:[#allocation16 + $0xc] sm:$0xf]
        %v640 = vunpack.c.l.b16 %v632
        %v641 = vunpack.c.l.b16 %v633
        %v642 = vunpack.c.l.b16 %v634
        %v643 = vunpack.c.l.b16 %v635
        %v644 = vpack.c.b16 %v641, %v640
        %v645 = vpack.c.b16 %v643, %v642
        %v649 = vsel %vm586, %v631, 0
        %651 = vmatprep.subr.bf16.mxu0 0
        %652 = vmatpush1.bf16.msra.mxu0 %v644
        %653 = vmatprep.subr.bf16.mxu0 0
        %654 = vmatpush1.bf16.msra.mxu0 %v645
        %655 = vmatprep.subr.bf16.mxu0 0
        %656 = vmatpush1.bf16.msra.mxu0 0
        %657 = vmatprep.subr.bf16.mxu0 0
        %658 = vmatpush1.bf16.msra.mxu0 0
        %659 = vmatprep.subr.bf16.mxu0 0
        %660 = vmatpush1.bf16.msra.mxu0 0
        %661 = vmatprep.subr.bf16.mxu0 0
        %662 = vmatpush1.bf16.msra.mxu0 0
        %663 = vmatprep.subr.bf16.mxu0 0
        %664 = vmatpush1.bf16.msra.mxu0 0
        %665 = vmatprep.subr.bf16.mxu0 0
        %666 = vmatpush1.bf16.msra.mxu0 0
        %667 = vmatprep.subr.bf16.mxu0 0
        %668 = vmatpush1.bf16.msra.mxu0 0
        %669 = vmatprep.subr.bf16.mxu0 0
        %670 = vmatpush1.bf16.msra.mxu0 0
        %671 = vmatprep.subr.bf16.mxu0 0
        %672 = vmatpush1.bf16.msra.mxu0 0
        %673 = vmatprep.subr.bf16.mxu0 0
        %674 = vmatpush1.bf16.msra.mxu0 0
        %675 = vmatprep.subr.bf16.mxu0 0
        %676 = vmatpush1.bf16.msra.mxu0 0
        %677 = vmatprep.subr.bf16.mxu0 0
        %678 = vmatpush1.bf16.msra.mxu0 0
        %679 = vmatprep.subr.bf16.mxu0 0
        %680 = vmatpush1.bf16.msra.mxu0 0
        %681 = vmatprep.subr.bf16.mxu0 0
        %682 = vmatpush1.bf16.msra.mxu0 0
        %683 = vmatprep.mubr.bf16.mxu0 0
        %684 = vmatmul.mubr.bf16.gmra.mrb[0].mxu0 %v649
        %v685 = vpop.f32.mrb[0].mxu0
        %v686 = vadd.f32 0.0, %v685
        %v687 = vpop.f32.mrb[0].mxu0
        %v688 = vpop.f32.mrb[0].mxu0
        %v689 = vpop.f32.mrb[0].mxu0
        %690 = vdwg.mxu0
        %v691 = vld [vmem:[#allocation2] sm:$0xff]
        %s692 = sld [smem:[#allocation7 + %s44]]
        %s693 = smul.u32 %s46, 8
        %v694 = vlaneseq
        %v695 = vand.u32 %v694, 127
        %v696 = vstv %s693
        %v697 = vadd.s32 %v696, %v695
        %v698 = vstv %s692
        %vm699 = vcmp.ge.s32.totalorder %v697, %v698
        %vm700 = vcmask 64512
        %v702 = vsel %vm700, %v691, 0
        %v705 = vsel %vm700, %v625, 0
        %707 = vmatprep.subr.mxu0 0.0
        %708 = vmatpush1.xpose.msra.mxu0 %v705
        %709 = vmatprep.subr.mxu0 0.0
        %710 = vmatpush1.xpose.msra.mxu0 0.0
        %711 = vmatprep.subr.mxu0 0.0
        %712 = vmatpush1.xpose.msra.mxu0 0.0
        %713 = vmatprep.subr.mxu0 0.0
        %714 = vmatpush1.xpose.msra.mxu0 0.0
        %715 = vmatprep.subr.mxu0 0.0
        %716 = vmatpush1.xpose.msra.mxu0 0.0
        %717 = vmatprep.subr.mxu0 0.0
        %718 = vmatpush1.xpose.msra.mxu0 0.0
        %719 = vmatprep.subr.mxu0 0.0
        %720 = vmatpush1.xpose.msra.mxu0 0.0
        %721 = vmatprep.subr.mxu0 0.0
        %722 = vmatpush1.xpose.msra.mxu0 0.0
        %723 = vmatprep.subr.mxu0 0.0
        %724 = vmatpush1.xpose.msra.mxu0 0.0
        %725 = vmatprep.subr.mxu0 0.0
        %726 = vmatpush1.xpose.msra.mxu0 0.0
        %727 = vmatprep.subr.mxu0 0.0
        %728 = vmatpush1.xpose.msra.mxu0 0.0
        %729 = vmatprep.subr.mxu0 0.0
        %730 = vmatpush1.xpose.msra.mxu0 0.0
        %731 = vmatprep.subr.mxu0 0.0
        %732 = vmatpush1.xpose.msra.mxu0 0.0
        %733 = vmatprep.subr.mxu0 0.0
        %734 = vmatpush1.xpose.msra.mxu0 0.0
        %735 = vmatprep.subr.mxu0 0.0
        %736 = vmatpush1.xpose.msra.mxu0 0.0
        %737 = vmatprep.subr.mxu0 0.0
        %738 = vmatpush1.xpose.msra.mxu0 0.0
        %739 = vmatprep.subr.mxu0 0.0
        %740 = vmatpush1.xpose.msra.mxu0 0.0
        %741 = vmatprep.subr.mxu0 0.0
        %742 = vmatpush1.xpose.msra.mxu0 0.0
        %743 = vmatprep.subr.mxu0 0.0
        %744 = vmatpush1.xpose.msra.mxu0 0.0
        %745 = vmatprep.subr.mxu0 0.0
        %746 = vmatpush1.xpose.msra.mxu0 0.0
        %747 = vmatprep.subr.mxu0 0.0
        %748 = vmatpush1.xpose.msra.mxu0 0.0
        %749 = vmatprep.subr.mxu0 0.0
        %750 = vmatpush1.xpose.msra.mxu0 0.0
        %751 = vmatprep.subr.mxu0 0.0
        %752 = vmatpush1.xpose.msra.mxu0 0.0
        %753 = vmatprep.subr.mxu0 0.0
        %754 = vmatpush1.xpose.msra.mxu0 0.0
        %755 = vmatprep.subr.mxu0 0.0
        %756 = vmatpush1.xpose.msra.mxu0 0.0
        %757 = vmatprep.subr.mxu0 0.0
        %758 = vmatpush1.xpose.msra.mxu0 0.0
        %759 = vmatprep.subr.mxu0 0.0
        %760 = vmatpush1.xpose.msra.mxu0 0.0
        %761 = vmatprep.subr.mxu0 0.0
        %762 = vmatpush1.xpose.msra.mxu0 0.0
        %763 = vmatprep.subr.mxu0 0.0
        %764 = vmatpush1.xpose.msra.mxu0 0.0
        %765 = vmatprep.subr.mxu0 0.0
        %766 = vmatpush1.xpose.msra.mxu0 0.0
        %767 = vmatprep.subr.mxu0 0.0
        %768 = vmatpush1.xpose.msra.mxu0 0.0
        %769 = vmatprep.subr.mxu0 0.0
        %770 = vmatpush1.xpose.msra.mxu0 0.0
        %771 = vmatprep.mubr.f32.mxu0 0.0
        %772 = vmatmul.mubr.f32.gmra.mrb[0].mxu0 %v702
        %v773 = vpop.f32.mrb[0].mxu0
        %v774 = vadd.f32 0.0, %v773
        %v775 = vpop.f32.mrb[0].mxu0
        %776 = vdwg.mxu0
        %v777 = vsel %vm699, -1e+18, %v774
        %v778 = vadd.f32 %v777, 0.0
        %v779 = vld [vmem:[#allocation3] sm:$0xff]
        %v780 = vsel %vm700, %v777, -inf
        %781 = vmax.xlane.f32.xlu0 %v780
        %v782 = vpop.xlane.xlu0 %781
        %v783 = vmax.f32 %v779, %v782
        %v784 = vsub.f32 %v779, %v783
        %v785 = vmul.f32 %v784, 1.442695
        %v786 = vpow.pop %v785
        %788 = vset.pattern.permute.xlu0 0
        %789 = vperm.xlu0 %788, %v783
        %v790 = vpop.permute.xlu0 %789
        %v792 = vsub.f32 %v777, %v790
        %v793 = vmul.f32 %v792, 1.442695
        %v794 = vpow.pop %v793
        %v795 = vld [vmem:[#allocation4] sm:$0xff]
        %v796 = vmul.f32 %v786, %v795
        %v797 = vsel %vm700, %v794, 0.0
        %798 = vadd.xlane.f32.xlu0 %v797
        %v799 = vpop.xlane.xlu0 %798
        %v800 = vadd.f32 %v796, %v799
        %vm801 = vcmask 7168
        %802 = vst.msk [vmem:[#allocation4] sm:$0xff] %vm801, %v800
        %v803 = vld [vmem:[#allocation5] sm:$0xff]
        %805 = vset.pattern.permute.xlu0 0
        %806 = vperm.xlu0 %805, %v786
        %v807 = vpop.permute.xlu0 %806
        %v809 = vmul.f32 %v807, %v803
        %v811 = vsel %vm700, %v794, 0
        %813 = vmatprep.subr.mxu0 0.0
        %814 = vmatpush1.msra.mxu0 %v686
        %815 = vmatprep.subr.mxu0 0.0
        %816 = vmatpush1.msra.mxu0 0.0
        %817 = vmatprep.subr.mxu0 0.0
        %818 = vmatpush1.msra.mxu0 0.0
        %819 = vmatprep.subr.mxu0 0.0
        %820 = vmatpush1.msra.mxu0 0.0
        %821 = vmatprep.subr.mxu0 0.0
        %822 = vmatpush1.msra.mxu0 0.0
        %823 = vmatprep.subr.mxu0 0.0
        %824 = vmatpush1.msra.mxu0 0.0
        %825 = vmatprep.subr.mxu0 0.0
        %826 = vmatpush1.msra.mxu0 0.0
        %827 = vmatprep.subr.mxu0 0.0
        %828 = vmatpush1.msra.mxu0 0.0
        %829 = vmatprep.subr.mxu0 0.0
        %830 = vmatpush1.msra.mxu0 0.0
        %831 = vmatprep.subr.mxu0 0.0
        %832 = vmatpush1.msra.mxu0 0.0
        %833 = vmatprep.subr.mxu0 0.0
        %834 = vmatpush1.msra.mxu0 0.0
        %835 = vmatprep.subr.mxu0 0.0
        %836 = vmatpush1.msra.mxu0 0.0
        %837 = vmatprep.subr.mxu0 0.0
        %838 = vmatpush1.msra.mxu0 0.0
        %839 = vmatprep.subr.mxu0 0.0
        %840 = vmatpush1.msra.mxu0 0.0
        %841 = vmatprep.subr.mxu0 0.0
        %842 = vmatpush1.msra.mxu0 0.0
        %843 = vmatprep.subr.mxu0 0.0
        %844 = vmatpush1.msra.mxu0 0.0
        %845 = vmatprep.subr.mxu0 0.0
        %846 = vmatpush1.msra.mxu0 0.0
        %847 = vmatprep.subr.mxu0 0.0
        %848 = vmatpush1.msra.mxu0 0.0
        %849 = vmatprep.subr.mxu0 0.0
        %850 = vmatpush1.msra.mxu0 0.0
        %851 = vmatprep.subr.mxu0 0.0
        %852 = vmatpush1.msra.mxu0 0.0
        %853 = vmatprep.subr.mxu0 0.0
        %854 = vmatpush1.msra.mxu0 0.0
        %855 = vmatprep.subr.mxu0 0.0
        %856 = vmatpush1.msra.mxu0 0.0
        %857 = vmatprep.subr.mxu0 0.0
        %858 = vmatpush1.msra.mxu0 0.0
        %859 = vmatprep.subr.mxu0 0.0
        %860 = vmatpush1.msra.mxu0 0.0
        %861 = vmatprep.subr.mxu0 0.0
        %862 = vmatpush1.msra.mxu0 0.0
        %863 = vmatprep.subr.mxu0 0.0
        %864 = vmatpush1.msra.mxu0 0.0
        %865 = vmatprep.subr.mxu0 0.0
        %866 = vmatpush1.msra.mxu0 0.0
        %867 = vmatprep.subr.mxu0 0.0
        %868 = vmatpush1.msra.mxu0 0.0
        %869 = vmatprep.subr.mxu0 0.0
        %870 = vmatpush1.msra.mxu0 0.0
        %871 = vmatprep.subr.mxu0 0.0
        %872 = vmatpush1.msra.mxu0 0.0
        %873 = vmatprep.subr.mxu0 0.0
        %874 = vmatpush1.msra.mxu0 0.0
        %875 = vmatprep.subr.mxu0 0.0
        %876 = vmatpush1.msra.mxu0 0.0
        %877 = vmatprep.mubr.f32.mxu0 0.0
        %878 = vmatmul.mubr.f32.gmra.mrb[0].mxu0 %v811
        %v879 = vpop.f32.mrb[0].mxu0
        %v880 = vadd.f32 0.0, %v879
        %v881 = vpop.f32.mrb[0].mxu0
        %882 = vdwg.mxu0
        %v883 = vadd.f32 %v809, %v880
        %884 = vst.msk [vmem:[#allocation5] sm:$0xff] %vm700, %v883
        %885 = vst.msk [vmem:[#allocation3] sm:$0xff] %vm801, %v783
        %886 = vrot.lane.b32.xlu0 %v691, 120
        %v887 = vpop.permute.xlu0 %886
        %888 = vrot.lane.b32.xlu0 %v625, 120
        %v889 = vpop.permute.xlu0 %888
        %v890 = vsel %vm700, %v887, 0
        %v892 = vsel %vm700, %v889, 0
        %894 = vmatprep.subr.mxu0 0.0
        %895 = vmatpush1.xpose.msra.mxu0 %v892
        %896 = vmatprep.subr.mxu0 0.0
        %897 = vmatpush1.xpose.msra.mxu0 0.0
        %898 = vmatprep.subr.mxu0 0.0
        %899 = vmatpush1.xpose.msra.mxu0 0.0
        %900 = vmatprep.subr.mxu0 0.0
        %901 = vmatpush1.xpose.msra.mxu0 0.0
        %902 = vmatprep.subr.mxu0 0.0
        %903 = vmatpush1.xpose.msra.mxu0 0.0
        %904 = vmatprep.subr.mxu0 0.0
        %905 = vmatpush1.xpose.msra.mxu0 0.0
        %906 = vmatprep.subr.mxu0 0.0
        %907 = vmatpush1.xpose.msra.mxu0 0.0
        %908 = vmatprep.subr.mxu0 0.0
        %909 = vmatpush1.xpose.msra.mxu0 0.0
        %910 = vmatprep.subr.mxu0 0.0
        %911 = vmatpush1.xpose.msra.mxu0 0.0
        %912 = vmatprep.subr.mxu0 0.0
        %913 = vmatpush1.xpose.msra.mxu0 0.0
        %914 = vmatprep.subr.mxu0 0.0
        %915 = vmatpush1.xpose.msra.mxu0 0.0
        %916 = vmatprep.subr.mxu0 0.0
        %917 = vmatpush1.xpose.msra.mxu0 0.0
        %918 = vmatprep.subr.mxu0 0.0
        %919 = vmatpush1.xpose.msra.mxu0 0.0
        %920 = vmatprep.subr.mxu0 0.0
        %921 = vmatpush1.xpose.msra.mxu0 0.0
        %922 = vmatprep.subr.mxu0 0.0
        %923 = vmatpush1.xpose.msra.mxu0 0.0
        %924 = vmatprep.subr.mxu0 0.0
        %925 = vmatpush1.xpose.msra.mxu0 0.0
        %926 = vmatprep.subr.mxu0 0.0
        %927 = vmatpush1.xpose.msra.mxu0 0.0
        %928 = vmatprep.subr.mxu0 0.0
        %929 = vmatpush1.xpose.msra.mxu0 0.0
        %930 = vmatprep.subr.mxu0 0.0
        %931 = vmatpush1.xpose.msra.mxu0 0.0
        %932 = vmatprep.subr.mxu0 0.0
        %933 = vmatpush1.xpose.msra.mxu0 0.0
        %934 = vmatprep.subr.mxu0 0.0
        %935 = vmatpush1.xpose.msra.mxu0 0.0
        %936 = vmatprep.subr.mxu0 0.0
        %937 = vmatpush1.xpose.msra.mxu0 0.0
        %938 = vmatprep.subr.mxu0 0.0
        %939 = vmatpush1.xpose.msra.mxu0 0.0
        %940 = vmatprep.subr.mxu0 0.0
        %941 = vmatpush1.xpose.msra.mxu0 0.0
        %942 = vmatprep.subr.mxu0 0.0
        %943 = vmatpush1.xpose.msra.mxu0 0.0
        %944 = vmatprep.subr.mxu0 0.0
        %945 = vmatpush1.xpose.msra.mxu0 0.0
        %946 = vmatprep.subr.mxu0 0.0
        %947 = vmatpush1.xpose.msra.mxu0 0.0
        %948 = vmatprep.subr.mxu0 0.0
        %949 = vmatpush1.xpose.msra.mxu0 0.0
        %950 = vmatprep.subr.mxu0 0.0
        %951 = vmatpush1.xpose.msra.mxu0 0.0
        %952 = vmatprep.subr.mxu0 0.0
        %953 = vmatpush1.xpose.msra.mxu0 0.0
        %954 = vmatprep.subr.mxu0 0.0
        %955 = vmatpush1.xpose.msra.mxu0 0.0
        %956 = vmatprep.subr.mxu0 0.0
        %957 = vmatpush1.xpose.msra.mxu0 0.0
        %958 = vmatprep.mubr.f32.mxu0 0.0
        %959 = vmatmul.mubr.f32.gmra.mrb[0].mxu0 %v890
        %v960 = vpop.f32.mrb[0].mxu0
        %v961 = vadd.f32 0.0, %v960
        %v962 = vpop.f32.mrb[0].mxu0
        %963 = vdwg.mxu0
        %v964 = vsel %vm699, -1e+18, %v961
        %v965 = vadd.f32 %v778, %v964
        %s966 = scalar_lea.vmem [#allocation3], 8
        %v967 = vld [vmem:[%s966] sm:$0xff]
        %v968 = vsel %vm700, %v964, -inf
        %969 = vmax.xlane.f32.xlu0 %v968
        %v970 = vpop.xlane.xlu0 %969
        %v971 = vmax.f32 %v967, %v970
        %v972 = vsub.f32 %v967, %v971
        %v973 = vmul.f32 %v972, 1.442695
        %v974 = vpow.pop %v973
        %976 = vset.pattern.permute.xlu0 0
        %977 = vperm.xlu0 %976, %v971
        %v978 = vpop.permute.xlu0 %977
        %v980 = vsub.f32 %v964, %v978
        %v981 = vmul.f32 %v980, 1.442695
        %v982 = vpow.pop %v981
        %s983 = scalar_lea.vmem [#allocation4], 8
        %v984 = vld [vmem:[%s983] sm:$0xff]
        %v985 = vmul.f32 %v974, %v984
        %v986 = vsel %vm700, %v982, 0.0
        %987 = vadd.xlane.f32.xlu0 %v986
        %v988 = vpop.xlane.xlu0 %987
        %v989 = vadd.f32 %v985, %v988
        %990 = vst.msk [vmem:[%s983] sm:$0xff] %vm801, %v989
        %s991 = scalar_lea.vmem [#allocation5], 8
        %v992 = vld [vmem:[%s991] sm:$0xff]
        %994 = vset.pattern.permute.xlu0 0
        %995 = vperm.xlu0 %994, %v974
        %v996 = vpop.permute.xlu0 %995
        %v998 = vmul.f32 %v996, %v992
        %1000 = vrot.lane.b32.xlu0 %v686, 120
        %v1001 = vpop.permute.xlu0 %1000
        %v1004 = vsel %vm700, %v982, 0
        %1006 = vmatprep.subr.mxu0 0.0
        %1007 = vmatpush1.msra.mxu0 %v1001
        %1008 = vmatprep.subr.mxu0 0.0
        %1009 = vmatpush1.msra.mxu0 0.0
        %1010 = vmatprep.subr.mxu0 0.0
        %1011 = vmatpush1.msra.mxu0 0.0
        %1012 = vmatprep.subr.mxu0 0.0
        %1013 = vmatpush1.msra.mxu0 0.0
        %1014 = vmatprep.subr.mxu0 0.0
        %1015 = vmatpush1.msra.mxu0 0.0
        %1016 = vmatprep.subr.mxu0 0.0
        %1017 = vmatpush1.msra.mxu0 0.0
        %1018 = vmatprep.subr.mxu0 0.0
        %1019 = vmatpush1.msra.mxu0 0.0
        %1020 = vmatprep.subr.mxu0 0.0
        %1021 = vmatpush1.msra.mxu0 0.0
        %1022 = vmatprep.subr.mxu0 0.0
        %1023 = vmatpush1.msra.mxu0 0.0
        %1024 = vmatprep.subr.mxu0 0.0
        %1025 = vmatpush1.msra.mxu0 0.0
        %1026 = vmatprep.subr.mxu0 0.0
        %1027 = vmatpush1.msra.mxu0 0.0
        %1028 = vmatprep.subr.mxu0 0.0
        %1029 = vmatpush1.msra.mxu0 0.0
        %1030 = vmatprep.subr.mxu0 0.0
        %1031 = vmatpush1.msra.mxu0 0.0
        %1032 = vmatprep.subr.mxu0 0.0
        %1033 = vmatpush1.msra.mxu0 0.0
        %1034 = vmatprep.subr.mxu0 0.0
        %1035 = vmatpush1.msra.mxu0 0.0
        %1036 = vmatprep.subr.mxu0 0.0
        %1037 = vmatpush1.msra.mxu0 0.0
        %1038 = vmatprep.subr.mxu0 0.0
        %1039 = vmatpush1.msra.mxu0 0.0
        %1040 = vmatprep.subr.mxu0 0.0
        %1041 = vmatpush1.msra.mxu0 0.0
        %1042 = vmatprep.subr.mxu0 0.0
        %1043 = vmatpush1.msra.mxu0 0.0
        %1044 = vmatprep.subr.mxu0 0.0
        %1045 = vmatpush1.msra.mxu0 0.0
        %1046 = vmatprep.subr.mxu0 0.0
        %1047 = vmatpush1.msra.mxu0 0.0
        %1048 = vmatprep.subr.mxu0 0.0
        %1049 = vmatpush1.msra.mxu0 0.0
        %1050 = vmatprep.subr.mxu0 0.0
        %1051 = vmatpush1.msra.mxu0 0.0
        %1052 = vmatprep.subr.mxu0 0.0
        %1053 = vmatpush1.msra.mxu0 0.0
        %1054 = vmatprep.subr.mxu0 0.0
        %1055 = vmatpush1.msra.mxu0 0.0
        %1056 = vmatprep.subr.mxu0 0.0
        %1057 = vmatpush1.msra.mxu0 0.0
        %1058 = vmatprep.subr.mxu0 0.0
        %1059 = vmatpush1.msra.mxu0 0.0
        %1060 = vmatprep.subr.mxu0 0.0
        %1061 = vmatpush1.msra.mxu0 0.0
        %1062 = vmatprep.subr.mxu0 0.0
        %1063 = vmatpush1.msra.mxu0 0.0
        %1064 = vmatprep.subr.mxu0 0.0
        %1065 = vmatpush1.msra.mxu0 0.0
        %1066 = vmatprep.subr.mxu0 0.0
        %1067 = vmatpush1.msra.mxu0 0.0
        %1068 = vmatprep.subr.mxu0 0.0
        %1069 = vmatpush1.msra.mxu0 0.0
        %1070 = vmatprep.mubr.f32.mxu0 0.0
        %1071 = vmatmul.mubr.f32.gmra.mrb[0].mxu0 %v1004
        %v1072 = vpop.f32.mrb[0].mxu0
        %v1073 = vadd.f32 0.0, %v1072
        %v1074 = vpop.f32.mrb[0].mxu0
        %1075 = vdwg.mxu0
        %v1076 = vadd.f32 %v998, %v1073
        %1077 = vst.msk [vmem:[%s991] sm:$0xff] %vm700, %v1076
        %1078 = vst.msk [vmem:[%s966] sm:$0xff] %vm801, %v971
        %1079 = vrot.lane.b32.xlu0 %v691, 112
        %v1080 = vpop.permute.xlu0 %1079
        %1081 = vrot.lane.b32.xlu0 %v625, 112
        %v1082 = vpop.permute.xlu0 %1081
        %v1083 = vsel %vm700, %v1080, 0
        %v1085 = vsel %vm700, %v1082, 0
        %1087 = vmatprep.subr.mxu0 0.0
        %1088 = vmatpush1.xpose.msra.mxu0 %v1085
        %1089 = vmatprep.subr.mxu0 0.0
        %1090 = vmatpush1.xpose.msra.mxu0 0.0
        %1091 = vmatprep.subr.mxu0 0.0
        %1092 = vmatpush1.xpose.msra.mxu0 0.0
        %1093 = vmatprep.subr.mxu0 0.0
        %1094 = vmatpush1.xpose.msra.mxu0 0.0
        %1095 = vmatprep.subr.mxu0 0.0
        %1096 = vmatpush1.xpose.msra.mxu0 0.0
        %1097 = vmatprep.subr.mxu0 0.0
        %1098 = vmatpush1.xpose.msra.mxu0 0.0
        %1099 = vmatprep.subr.mxu0 0.0
        %1100 = vmatpush1.xpose.msra.mxu0 0.0
        %1101 = vmatprep.subr.mxu0 0.0
        %1102 = vmatpush1.xpose.msra.mxu0 0.0
        %1103 = vmatprep.subr.mxu0 0.0
        %1104 = vmatpush1.xpose.msra.mxu0 0.0
        %1105 = vmatprep.subr.mxu0 0.0
        %1106 = vmatpush1.xpose.msra.mxu0 0.0
        %1107 = vmatprep.subr.mxu0 0.0
        %1108 = vmatpush1.xpose.msra.mxu0 0.0
        %1109 = vmatprep.subr.mxu0 0.0
        %1110 = vmatpush1.xpose.msra.mxu0 0.0
        %1111 = vmatprep.subr.mxu0 0.0
        %1112 = vmatpush1.xpose.msra.mxu0 0.0
        %1113 = vmatprep.subr.mxu0 0.0
        %1114 = vmatpush1.xpose.msra.mxu0 0.0
        %1115 = vmatprep.subr.mxu0 0.0
        %1116 = vmatpush1.xpose.msra.mxu0 0.0
        %1117 = vmatprep.subr.mxu0 0.0
        %1118 = vmatpush1.xpose.msra.mxu0 0.0
        %1119 = vmatprep.subr.mxu0 0.0
        %1120 = vmatpush1.xpose.msra.mxu0 0.0
        %1121 = vmatprep.subr.mxu0 0.0
        %1122 = vmatpush1.xpose.msra.mxu0 0.0
        %1123 = vmatprep.subr.mxu0 0.0
        %1124 = vmatpush1.xpose.msra.mxu0 0.0
        %1125 = vmatprep.subr.mxu0 0.0
        %1126 = vmatpush1.xpose.msra.mxu0 0.0
        %1127 = vmatprep.subr.mxu0 0.0
        %1128 = vmatpush1.xpose.msra.mxu0 0.0
        %1129 = vmatprep.subr.mxu0 0.0
        %1130 = vmatpush1.xpose.msra.mxu0 0.0
        %1131 = vmatprep.subr.mxu0 0.0
        %1132 = vmatpush1.xpose.msra.mxu0 0.0
        %1133 = vmatprep.subr.mxu0 0.0
        %1134 = vmatpush1.xpose.msra.mxu0 0.0
        %1135 = vmatprep.subr.mxu0 0.0
        %1136 = vmatpush1.xpose.msra.mxu0 0.0
        %1137 = vmatprep.subr.mxu0 0.0
        %1138 = vmatpush1.xpose.msra.mxu0 0.0
        %1139 = vmatprep.subr.mxu0 0.0
        %1140 = vmatpush1.xpose.msra.mxu0 0.0
        %1141 = vmatprep.subr.mxu0 0.0
        %1142 = vmatpush1.xpose.msra.mxu0 0.0
        %1143 = vmatprep.subr.mxu0 0.0
        %1144 = vmatpush1.xpose.msra.mxu0 0.0
        %1145 = vmatprep.subr.mxu0 0.0
        %1146 = vmatpush1.xpose.msra.mxu0 0.0
        %1147 = vmatprep.subr.mxu0 0.0
        %1148 = vmatpush1.xpose.msra.mxu0 0.0
        %1149 = vmatprep.subr.mxu0 0.0
        %1150 = vmatpush1.xpose.msra.mxu0 0.0
        %1151 = vmatprep.mubr.f32.mxu0 0.0
        %1152 = vmatmul.mubr.f32.gmra.mrb[0].mxu0 %v1083
        %v1153 = vpop.f32.mrb[0].mxu0
        %v1154 = vadd.f32 0.0, %v1153
        %v1155 = vpop.f32.mrb[0].mxu0
        %1156 = vdwg.mxu0
        %v1157 = vsel %vm699, -1e+18, %v1154
        %v1158 = vadd.f32 %v965, %v1157
        %s1159 = scalar_lea.vmem [#allocation3], 16
        %v1160 = vld [vmem:[%s1159] sm:$0xff]
        %v1161 = vsel %vm700, %v1157, -inf
        %1162 = vmax.xlane.f32.xlu0 %v1161
        %v1163 = vpop.xlane.xlu0 %1162
        %v1164 = vmax.f32 %v1160, %v1163
        %v1165 = vsub.f32 %v1160, %v1164
        %v1166 = vmul.f32 %v1165, 1.442695
        %v1167 = vpow.pop %v1166
        %1169 = vset.pattern.permute.xlu0 0
        %1170 = vperm.xlu0 %1169, %v1164
        %v1171 = vpop.permute.xlu0 %1170
        %v1173 = vsub.f32 %v1157, %v1171
        %v1174 = vmul.f32 %v1173, 1.442695
        %v1175 = vpow.pop %v1174
        %s1176 = scalar_lea.vmem [#allocation4], 16
        %v1177 = vld [vmem:[%s1176] sm:$0xff]
        %v1178 = vmul.f32 %v1167, %v1177
        %v1179 = vsel %vm700, %v1175, 0.0
        %1180 = vadd.xlane.f32.xlu0 %v1179
        %v1181 = vpop.xlane.xlu0 %1180
        %v1182 = vadd.f32 %v1178, %v1181
        %1183 = vst.msk [vmem:[%s1176] sm:$0xff] %vm801, %v1182
        %s1184 = scalar_lea.vmem [#allocation5], 16
        %v1185 = vld [vmem:[%s1184] sm:$0xff]
        %1187 = vset.pattern.permute.xlu0 0
        %1188 = vperm.xlu0 %1187, %v1167
        %v1189 = vpop.permute.xlu0 %1188
        %v1191 = vmul.f32 %v1189, %v1185
        %1192 = vrot.lane.b32.xlu0 %v686, 112
        %v1193 = vpop.permute.xlu0 %1192
        %v1196 = vsel %vm700, %v1175, 0
        %1198 = vmatprep.subr.mxu0 0.0
        %1199 = vmatpush1.msra.mxu0 %v1193
        %1200 = vmatprep.subr.mxu0 0.0
        %1201 = vmatpush1.msra.mxu0 0.0
        %1202 = vmatprep.subr.mxu0 0.0
        %1203 = vmatpush1.msra.mxu0 0.0
        %1204 = vmatprep.subr.mxu0 0.0
        %1205 = vmatpush1.msra.mxu0 0.0
        %1206 = vmatprep.subr.mxu0 0.0
        %1207 = vmatpush1.msra.mxu0 0.0
        %1208 = vmatprep.subr.mxu0 0.0
        %1209 = vmatpush1.msra.mxu0 0.0
        %1210 = vmatprep.subr.mxu0 0.0
        %1211 = vmatpush1.msra.mxu0 0.0
        %1212 = vmatprep.subr.mxu0 0.0
        %1213 = vmatpush1.msra.mxu0 0.0
        %1214 = vmatprep.subr.mxu0 0.0
        %1215 = vmatpush1.msra.mxu0 0.0
        %1216 = vmatprep.subr.mxu0 0.0
        %1217 = vmatpush1.msra.mxu0 0.0
        %1218 = vmatprep.subr.mxu0 0.0
        %1219 = vmatpush1.msra.mxu0 0.0
        %1220 = vmatprep.subr.mxu0 0.0
        %1221 = vmatpush1.msra.mxu0 0.0
        %1222 = vmatprep.subr.mxu0 0.0
        %1223 = vmatpush1.msra.mxu0 0.0
        %1224 = vmatprep.subr.mxu0 0.0
        %1225 = vmatpush1.msra.mxu0 0.0
        %1226 = vmatprep.subr.mxu0 0.0
        %1227 = vmatpush1.msra.mxu0 0.0
        %1228 = vmatprep.subr.mxu0 0.0
        %1229 = vmatpush1.msra.mxu0 0.0
        %1230 = vmatprep.subr.mxu0 0.0
        %1231 = vmatpush1.msra.mxu0 0.0
        %1232 = vmatprep.subr.mxu0 0.0
        %1233 = vmatpush1.msra.mxu0 0.0
        %1234 = vmatprep.subr.mxu0 0.0
        %1235 = vmatpush1.msra.mxu0 0.0
        %1236 = vmatprep.subr.mxu0 0.0
        %1237 = vmatpush1.msra.mxu0 0.0
        %1238 = vmatprep.subr.mxu0 0.0
        %1239 = vmatpush1.msra.mxu0 0.0
        %1240 = vmatprep.subr.mxu0 0.0
        %1241 = vmatpush1.msra.mxu0 0.0
        %1242 = vmatprep.subr.mxu0 0.0
        %1243 = vmatpush1.msra.mxu0 0.0
        %1244 = vmatprep.subr.mxu0 0.0
        %1245 = vmatpush1.msra.mxu0 0.0
        %1246 = vmatprep.subr.mxu0 0.0
        %1247 = vmatpush1.msra.mxu0 0.0
        %1248 = vmatprep.subr.mxu0 0.0
        %1249 = vmatpush1.msra.mxu0 0.0
        %1250 = vmatprep.subr.mxu0 0.0
        %1251 = vmatpush1.msra.mxu0 0.0
        %1252 = vmatprep.subr.mxu0 0.0
        %1253 = vmatpush1.msra.mxu0 0.0
        %1254 = vmatprep.subr.mxu0 0.0
        %1255 = vmatpush1.msra.mxu0 0.0
        %1256 = vmatprep.subr.mxu0 0.0
        %1257 = vmatpush1.msra.mxu0 0.0
        %1258 = vmatprep.subr.mxu0 0.0
        %1259 = vmatpush1.msra.mxu0 0.0
        %1260 = vmatprep.subr.mxu0 0.0
        %1261 = vmatpush1.msra.mxu0 0.0
        %1262 = vmatprep.mubr.f32.mxu0 0.0
        %1263 = vmatmul.mubr.f32.gmra.mrb[0].mxu0 %v1196
        %v1264 = vpop.f32.mrb[0].mxu0
        %v1265 = vadd.f32 0.0, %v1264
        %v1266 = vpop.f32.mrb[0].mxu0
        %1267 = vdwg.mxu0
        %v1268 = vadd.f32 %v1191, %v1265
        %1269 = vst.msk [vmem:[%s1184] sm:$0xff] %vm700, %v1268
        %1270 = vst.msk [vmem:[%s1159] sm:$0xff] %vm801, %v1164
        %1271 = vrot.lane.b32.xlu0 %v691, 104
        %v1272 = vpop.permute.xlu0 %1271
        %1273 = vrot.lane.b32.xlu0 %v625, 104
        %v1274 = vpop.permute.xlu0 %1273
        %v1275 = vsel %vm700, %v1272, 0
        %v1277 = vsel %vm700, %v1274, 0
        %1279 = vmatprep.subr.mxu0 0.0
        %1280 = vmatpush1.xpose.msra.mxu0 %v1277
        %1281 = vmatprep.subr.mxu0 0.0
        %1282 = vmatpush1.xpose.msra.mxu0 0.0
        %1283 = vmatprep.subr.mxu0 0.0
        %1284 = vmatpush1.xpose.msra.mxu0 0.0
        %1285 = vmatprep.subr.mxu0 0.0
        %1286 = vmatpush1.xpose.msra.mxu0 0.0
        %1287 = vmatprep.subr.mxu0 0.0
        %1288 = vmatpush1.xpose.msra.mxu0 0.0
        %1289 = vmatprep.subr.mxu0 0.0
        %1290 = vmatpush1.xpose.msra.mxu0 0.0
        %1291 = vmatprep.subr.mxu0 0.0
        %1292 = vmatpush1.xpose.msra.mxu0 0.0
        %1293 = vmatprep.subr.mxu0 0.0
        %1294 = vmatpush1.xpose.msra.mxu0 0.0
        %1295 = vmatprep.subr.mxu0 0.0
        %1296 = vmatpush1.xpose.msra.mxu0 0.0
        %1297 = vmatprep.subr.mxu0 0.0
        %1298 = vmatpush1.xpose.msra.mxu0 0.0
        %1299 = vmatprep.subr.mxu0 0.0
        %1300 = vmatpush1.xpose.msra.mxu0 0.0
        %1301 = vmatprep.subr.mxu0 0.0
        %1302 = vmatpush1.xpose.msra.mxu0 0.0
        %1303 = vmatprep.subr.mxu0 0.0
        %1304 = vmatpush1.xpose.msra.mxu0 0.0
        %1305 = vmatprep.subr.mxu0 0.0
        %1306 = vmatpush1.xpose.msra.mxu0 0.0
        %1307 = vmatprep.subr.mxu0 0.0
        %1308 = vmatpush1.xpose.msra.mxu0 0.0
        %1309 = vmatprep.subr.mxu0 0.0
        %1310 = vmatpush1.xpose.msra.mxu0 0.0
        %1311 = vmatprep.subr.mxu0 0.0
        %1312 = vmatpush1.xpose.msra.mxu0 0.0
        %1313 = vmatprep.subr.mxu0 0.0
        %1314 = vmatpush1.xpose.msra.mxu0 0.0
        %1315 = vmatprep.subr.mxu0 0.0
        %1316 = vmatpush1.xpose.msra.mxu0 0.0
        %1317 = vmatprep.subr.mxu0 0.0
        %1318 = vmatpush1.xpose.msra.mxu0 0.0
        %1319 = vmatprep.subr.mxu0 0.0
        %1320 = vmatpush1.xpose.msra.mxu0 0.0
        %1321 = vmatprep.subr.mxu0 0.0
        %1322 = vmatpush1.xpose.msra.mxu0 0.0
        %1323 = vmatprep.subr.mxu0 0.0
        %1324 = vmatpush1.xpose.msra.mxu0 0.0
        %1325 = vmatprep.subr.mxu0 0.0
        %1326 = vmatpush1.xpose.msra.mxu0 0.0
        %1327 = vmatprep.subr.mxu0 0.0
        %1328 = vmatpush1.xpose.msra.mxu0 0.0
        %1329 = vmatprep.subr.mxu0 0.0
        %1330 = vmatpush1.xpose.msra.mxu0 0.0
        %1331 = vmatprep.subr.mxu0 0.0
        %1332 = vmatpush1.xpose.msra.mxu0 0.0
        %1333 = vmatprep.subr.mxu0 0.0
        %1334 = vmatpush1.xpose.msra.mxu0 0.0
        %1335 = vmatprep.subr.mxu0 0.0
        %1336 = vmatpush1.xpose.msra.mxu0 0.0
        %1337 = vmatprep.subr.mxu0 0.0
        %1338 = vmatpush1.xpose.msra.mxu0 0.0
        %1339 = vmatprep.subr.mxu0 0.0
        %1340 = vmatpush1.xpose.msra.mxu0 0.0
        %1341 = vmatprep.subr.mxu0 0.0
        %1342 = vmatpush1.xpose.msra.mxu0 0.0
        %1343 = vmatprep.mubr.f32.mxu0 0.0
        %1344 = vmatmul.mubr.f32.gmra.mrb[0].mxu0 %v1275
        %v1345 = vpop.f32.mrb[0].mxu0
        %v1346 = vadd.f32 0.0, %v1345
        %v1347 = vpop.f32.mrb[0].mxu0
        %1348 = vdwg.mxu0
        %v1349 = vsel %vm699, -1e+18, %v1346
        %v1350 = vadd.f32 %v1158, %v1349
        %s1351 = scalar_lea.vmem [#allocation3], 24
        %v1352 = vld [vmem:[%s1351] sm:$0xff]
        %v1353 = vsel %vm700, %v1349, -inf
        %1354 = vmax.xlane.f32.xlu0 %v1353
        %v1355 = vpop.xlane.xlu0 %1354
        %v1356 = vmax.f32 %v1352, %v1355
        %v1357 = vsub.f32 %v1352, %v1356
        %v1358 = vmul.f32 %v1357, 1.442695
        %v1359 = vpow.pop %v1358
        %1361 = vset.pattern.permute.xlu0 0
        %1362 = vperm.xlu0 %1361, %v1356
        %v1363 = vpop.permute.xlu0 %1362
        %v1365 = vsub.f32 %v1349, %v1363
        %v1366 = vmul.f32 %v1365, 1.442695
        %v1367 = vpow.pop %v1366
        %s1368 = scalar_lea.vmem [#allocation4], 24
        %v1369 = vld [vmem:[%s1368] sm:$0xff]
        %v1370 = vmul.f32 %v1359, %v1369
        %v1371 = vsel %vm700, %v1367, 0.0
        %1372 = vadd.xlane.f32.xlu0 %v1371
        %v1373 = vpop.xlane.xlu0 %1372
        %v1374 = vadd.f32 %v1370, %v1373
        %1375 = vst.msk [vmem:[%s1368] sm:$0xff] %vm801, %v1374
        %s1376 = scalar_lea.vmem [#allocation5], 24
        %v1377 = vld [vmem:[%s1376] sm:$0xff]
        %1379 = vset.pattern.permute.xlu0 0
        %1380 = vperm.xlu0 %1379, %v1359
        %v1381 = vpop.permute.xlu0 %1380
        %v1383 = vmul.f32 %v1381, %v1377
        %1384 = vrot.lane.b32.xlu0 %v686, 104
        %v1385 = vpop.permute.xlu0 %1384
        %v1388 = vsel %vm700, %v1367, 0
        %1390 = vmatprep.subr.mxu0 0.0
        %1391 = vmatpush1.msra.mxu0 %v1385
        %1392 = vmatprep.subr.mxu0 0.0
        %1393 = vmatpush1.msra.mxu0 0.0
        %1394 = vmatprep.subr.mxu0 0.0
        %1395 = vmatpush1.msra.mxu0 0.0
        %1396 = vmatprep.subr.mxu0 0.0
        %1397 = vmatpush1.msra.mxu0 0.0
        %1398 = vmatprep.subr.mxu0 0.0
        %1399 = vmatpush1.msra.mxu0 0.0
        %1400 = vmatprep.subr.mxu0 0.0
        %1401 = vmatpush1.msra.mxu0 0.0
        %1402 = vmatprep.subr.mxu0 0.0
        %1403 = vmatpush1.msra.mxu0 0.0
        %1404 = vmatprep.subr.mxu0 0.0
        %1405 = vmatpush1.msra.mxu0 0.0
        %1406 = vmatprep.subr.mxu0 0.0
        %1407 = vmatpush1.msra.mxu0 0.0
        %1408 = vmatprep.subr.mxu0 0.0
        %1409 = vmatpush1.msra.mxu0 0.0
        %1410 = vmatprep.subr.mxu0 0.0
        %1411 = vmatpush1.msra.mxu0 0.0
        %1412 = vmatprep.subr.mxu0 0.0
        %1413 = vmatpush1.msra.mxu0 0.0
        %1414 = vmatprep.subr.mxu0 0.0
        %1415 = vmatpush1.msra.mxu0 0.0
        %1416 = vmatprep.subr.mxu0 0.0
        %1417 = vmatpush1.msra.mxu0 0.0
        %1418 = vmatprep.subr.mxu0 0.0
        %1419 = vmatpush1.msra.mxu0 0.0
        %1420 = vmatprep.subr.mxu0 0.0
        %1421 = vmatpush1.msra.mxu0 0.0
        %1422 = vmatprep.subr.mxu0 0.0
        %1423 = vmatpush1.msra.mxu0 0.0
        %1424 = vmatprep.subr.mxu0 0.0
        %1425 = vmatpush1.msra.mxu0 0.0
        %1426 = vmatprep.subr.mxu0 0.0
        %1427 = vmatpush1.msra.mxu0 0.0
        %1428 = vmatprep.subr.mxu0 0.0
        %1429 = vmatpush1.msra.mxu0 0.0
        %1430 = vmatprep.subr.mxu0 0.0
        %1431 = vmatpush1.msra.mxu0 0.0
        %1432 = vmatprep.subr.mxu0 0.0
        %1433 = vmatpush1.msra.mxu0 0.0
        %1434 = vmatprep.subr.mxu0 0.0
        %1435 = vmatpush1.msra.mxu0 0.0
        %1436 = vmatprep.subr.mxu0 0.0
        %1437 = vmatpush1.msra.mxu0 0.0
        %1438 = vmatprep.subr.mxu0 0.0
        %1439 = vmatpush1.msra.mxu0 0.0
        %1440 = vmatprep.subr.mxu0 0.0
        %1441 = vmatpush1.msra.mxu0 0.0
        %1442 = vmatprep.subr.mxu0 0.0
        %1443 = vmatpush1.msra.mxu0 0.0
        %1444 = vmatprep.subr.mxu0 0.0
        %1445 = vmatpush1.msra.mxu0 0.0
        %1446 = vmatprep.subr.mxu0 0.0
        %1447 = vmatpush1.msra.mxu0 0.0
        %1448 = vmatprep.subr.mxu0 0.0
        %1449 = vmatpush1.msra.mxu0 0.0
        %1450 = vmatprep.subr.mxu0 0.0
        %1451 = vmatpush1.msra.mxu0 0.0
        %1452 = vmatprep.subr.mxu0 0.0
        %1453 = vmatpush1.msra.mxu0 0.0
        %1454 = vmatprep.mubr.f32.mxu0 0.0
        %1455 = vmatmul.mubr.f32.gmra.mrb[0].mxu0 %v1388
        %v1456 = vpop.f32.mrb[0].mxu0
        %v1457 = vadd.f32 0.0, %v1456
        %v1458 = vpop.f32.mrb[0].mxu0
        %1459 = vdwg.mxu0
        %v1460 = vadd.f32 %v1383, %v1457
        %1461 = vst.msk [vmem:[%s1376] sm:$0xff] %vm700, %v1460
        %1462 = vst.msk [vmem:[%s1351] sm:$0xff] %vm801, %v1356
        %v1463 = vmul.f32 %v1350, 0.25
        %1464 = vst.msk [vmem:[%s485] sm:$0xff] %vm700, %v1463
        // Predicated region
        $region77: #{tpu_custom_call.1} parent=47 // pred_check
          %p1465 = pneg %p487
        $region78: #{tpu_custom_call.1} parent=47 // pred_check_branch
          %1467 = sbr.rel (%p1465) target = $region80
        $region79: #{tpu_custom_call.1} parent=47 // pred_region
          %v1468 = vld [vmem:[#allocation4] sm:$0xff]
          %v1469 = vrcp.pop %v1468
          %v1470 = vld [vmem:[#allocation5] sm:$0xff]
          %1472 = vset.pattern.permute.xlu0 0
          %1473 = vperm.xlu0 %1472, %v1469
          %v1474 = vpop.permute.xlu0 %1473
          %v1476 = vmul.f32 %v1470, %v1474
          %v1477 = vpack.c.bf16 %v1476, %v1476
          %v1478 = vld [vmem:[#allocation17] sm:$0xf]
          %v1479 = vld [vmem:[%s983] sm:$0xff]
          %v1480 = vrcp.pop %v1479
          %v1481 = vld [vmem:[%s991] sm:$0xff]
          %1483 = vset.pattern.permute.xlu0 0
          %1484 = vperm.xlu0 %1483, %v1480
          %v1485 = vpop.permute.xlu0 %1484
          %v1487 = vmul.f32 %v1481, %v1485
          %v1488 = vpack.c.bf16 %v1487, %v1487
          %v1489 = vld [vmem:[#allocation17 + $0x4] sm:$0xf]
          %v1491 = vsel %vm700, %v1488, 0
          %vm1493 = vcmask 1043456
          %v1495 = vsel %vm1493, %v1489, 0
          %1497 = vmatprep.subr.bf16.mxu0 0
          %1498 = vmatpush1.bf16.msra.mxu0 %v1495
          %1499 = vmatprep.subr.bf16.mxu0 0
          %1500 = vmatpush1.bf16.msra.mxu0 0
          %1501 = vmatprep.subr.bf16.mxu0 0
          %1502 = vmatpush1.bf16.msra.mxu0 0
          %1503 = vmatprep.subr.bf16.mxu0 0
          %1504 = vmatpush1.bf16.msra.mxu0 0
          %1505 = vmatprep.subr.bf16.mxu0 0
          %1506 = vmatpush1.bf16.msra.mxu0 0
          %1507 = vmatprep.subr.bf16.mxu0 0
          %1508 = vmatpush1.bf16.msra.mxu0 0
          %1509 = vmatprep.subr.bf16.mxu0 0
          %1510 = vmatpush1.bf16.msra.mxu0 0
          %1511 = vmatprep.subr.bf16.mxu0 0
          %1512 = vmatpush1.bf16.msra.mxu0 0
          %1513 = vmatprep.subr.bf16.mxu0 0
          %1514 = vmatpush1.bf16.msra.mxu0 0
          %1515 = vmatprep.subr.bf16.mxu0 0
          %1516 = vmatpush1.bf16.msra.mxu0 0
          %1517 = vmatprep.subr.bf16.mxu0 0
          %1518 = vmatpush1.bf16.msra.mxu0 0
          %1519 = vmatprep.subr.bf16.mxu0 0
          %1520 = vmatpush1.bf16.msra.mxu0 0
          %1521 = vmatprep.subr.bf16.mxu0 0
          %1522 = vmatpush1.bf16.msra.mxu0 0
          %1523 = vmatprep.subr.bf16.mxu0 0
          %1524 = vmatpush1.bf16.msra.mxu0 0
          %1525 = vmatprep.subr.bf16.mxu0 0
          %1526 = vmatpush1.bf16.msra.mxu0 0
          %1527 = vmatprep.subr.bf16.mxu0 0
          %1528 = vmatpush1.bf16.msra.mxu0 0
          %1529 = vmatprep.mubr.bf16.mxu0 0
          %1530 = vmatmul.mubr.bf16.gmra.mrb[0].mxu0 %v1491
          %v1531 = vpop.f32.mrb[0].mxu0
          %v1532 = vadd.f32 0.0, %v1531
          %v1533 = vpop.f32.mrb[0].mxu0
          %v1534 = vpop.f32.mrb[0].mxu0
          %v1535 = vpop.f32.mrb[0].mxu0
          %1536 = vdwg.mxu0
          %v1538 = vsel %vm700, %v1477, 0
          %v1541 = vsel %vm1493, %v1478, 0
          %1543 = vmatprep.subr.bf16.mxu0 0
          %1544 = vmatpush1.bf16.msra.mxu0 %v1541
          %1545 = vmatprep.subr.bf16.mxu0 0
          %1546 = vmatpush1.bf16.msra.mxu0 0
          %1547 = vmatprep.subr.bf16.mxu0 0
          %1548 = vmatpush1.bf16.msra.mxu0 0
          %1549 = vmatprep.subr.bf16.mxu0 0
          %1550 = vmatpush1.bf16.msra.mxu0 0
          %1551 = vmatprep.subr.bf16.mxu0 0
          %1552 = vmatpush1.bf16.msra.mxu0 0
          %1553 = vmatprep.subr.bf16.mxu0 0
          %1554 = vmatpush1.bf16.msra.mxu0 0
          %1555 = vmatprep.subr.bf16.mxu0 0
          %1556 = vmatpush1.bf16.msra.mxu0 0
          %1557 = vmatprep.subr.bf16.mxu0 0
          %1558 = vmatpush1.bf16.msra.mxu0 0
          %1559 = vmatprep.subr.bf16.mxu0 0
          %1560 = vmatpush1.bf16.msra.mxu0 0
          %1561 = vmatprep.subr.bf16.mxu0 0
          %1562 = vmatpush1.bf16.msra.mxu0 0
          %1563 = vmatprep.subr.bf16.mxu0 0
          %1564 = vmatpush1.bf16.msra.mxu0 0
          %1565 = vmatprep.subr.bf16.mxu0 0
          %1566 = vmatpush1.bf16.msra.mxu0 0
          %1567 = vmatprep.subr.bf16.mxu0 0
          %1568 = vmatpush1.bf16.msra.mxu0 0
          %1569 = vmatprep.subr.bf16.mxu0 0
          %1570 = vmatpush1.bf16.msra.mxu0 0
          %1571 = vmatprep.subr.bf16.mxu0 0
          %1572 = vmatpush1.bf16.msra.mxu0 0
          %1573 = vmatprep.subr.bf16.mxu0 0
          %1574 = vmatpush1.bf16.msra.mxu0 0
          %1575 = vmatprep.mubr.bf16.mxu0 0
          %1576 = vmatmul.mubr.bf16.gmra.mrb[0].mxu0 %v1538
          %v1577 = vpop.f32.mrb[0].mxu0
          %v1578 = vadd.f32 %v1532, %v1577
          %v1579 = vpop.f32.mrb[0].mxu0
          %v1580 = vpop.f32.mrb[0].mxu0
          %v1581 = vpop.f32.mrb[0].mxu0
          %1582 = vdwg.mxu0
          %v1583 = vld [vmem:[%s1176] sm:$0xff]
          %v1584 = vrcp.pop %v1583
          %v1585 = vld [vmem:[%s1184] sm:$0xff]
          %1587 = vset.pattern.permute.xlu0 0
          %1588 = vperm.xlu0 %1587, %v1584
          %v1589 = vpop.permute.xlu0 %1588
          %v1591 = vmul.f32 %v1585, %v1589
          %v1592 = vpack.c.bf16 %v1591, %v1591
          %v1593 = vld [vmem:[#allocation17 + $0x8] sm:$0xf]
          %v1595 = vsel %vm700, %v1592, 0
          %v1598 = vsel %vm1493, %v1593, 0
          %1600 = vmatprep.subr.bf16.mxu0 0
          %1601 = vmatpush1.bf16.msra.mxu0 %v1598
          %1602 = vmatprep.subr.bf16.mxu0 0
          %1603 = vmatpush1.bf16.msra.mxu0 0
          %1604 = vmatprep.subr.bf16.mxu0 0
          %1605 = vmatpush1.bf16.msra.mxu0 0
          %1606 = vmatprep.subr.bf16.mxu0 0
          %1607 = vmatpush1.bf16.msra.mxu0 0
          %1608 = vmatprep.subr.bf16.mxu0 0
          %1609 = vmatpush1.bf16.msra.mxu0 0
          %1610 = vmatprep.subr.bf16.mxu0 0
          %1611 = vmatpush1.bf16.msra.mxu0 0
          %1612 = vmatprep.subr.bf16.mxu0 0
          %1613 = vmatpush1.bf16.msra.mxu0 0
          %1614 = vmatprep.subr.bf16.mxu0 0
          %1615 = vmatpush1.bf16.msra.mxu0 0
          %1616 = vmatprep.subr.bf16.mxu0 0
          %1617 = vmatpush1.bf16.msra.mxu0 0
          %1618 = vmatprep.subr.bf16.mxu0 0
          %1619 = vmatpush1.bf16.msra.mxu0 0
          %1620 = vmatprep.subr.bf16.mxu0 0
          %1621 = vmatpush1.bf16.msra.mxu0 0
          %1622 = vmatprep.subr.bf16.mxu0 0
          %1623 = vmatpush1.bf16.msra.mxu0 0
          %1624 = vmatprep.subr.bf16.mxu0 0
          %1625 = vmatpush1.bf16.msra.mxu0 0
          %1626 = vmatprep.subr.bf16.mxu0 0
          %1627 = vmatpush1.bf16.msra.mxu0 0
          %1628 = vmatprep.subr.bf16.mxu0 0
          %1629 = vmatpush1.bf16.msra.mxu0 0
          %1630 = vmatprep.subr.bf16.mxu0 0
          %1631 = vmatpush1.bf16.msra.mxu0 0
          %1632 = vmatprep.mubr.bf16.mxu0 0
          %1633 = vmatmul.mubr.bf16.gmra.mrb[0].mxu0 %v1595
          %v1634 = vpop.f32.mrb[0].mxu0
          %v1635 = vadd.f32 0.0, %v1634
          %v1636 = vpop.f32.mrb[0].mxu0
          %v1637 = vpop.f32.mrb[0].mxu0
          %v1638 = vpop.f32.mrb[0].mxu0
          %1639 = vdwg.mxu0
          %v1640 = vadd.f32 %v1578, %v1635
          %v1641 = vld [vmem:[%s1368] sm:$0xff]
          %v1642 = vrcp.pop %v1641
          %v1643 = vld [vmem:[%s1376] sm:$0xff]
          %1645 = vset.pattern.permute.xlu0 0
          %1646 = vperm.xlu0 %1645, %v1642
          %v1647 = vpop.permute.xlu0 %1646
          %v1649 = vmul.f32 %v1643, %v1647
          %v1650 = vpack.c.bf16 %v1649, %v1649
          %v1651 = vld [vmem:[#allocation17 + $0xc] sm:$0xf]
          %v1653 = vsel %vm700, %v1650, 0
          %v1656 = vsel %vm1493, %v1651, 0
          %1658 = vmatprep.subr.bf16.mxu0 0
          %1659 = vmatpush1.bf16.msra.mxu0 %v1656
          %1660 = vmatprep.subr.bf16.mxu0 0
          %1661 = vmatpush1.bf16.msra.mxu0 0
          %1662 = vmatprep.subr.bf16.mxu0 0
          %1663 = vmatpush1.bf16.msra.mxu0 0
          %1664 = vmatprep.subr.bf16.mxu0 0
          %1665 = vmatpush1.bf16.msra.mxu0 0
          %1666 = vmatprep.subr.bf16.mxu0 0
          %1667 = vmatpush1.bf16.msra.mxu0 0
          %1668 = vmatprep.subr.bf16.mxu0 0
          %1669 = vmatpush1.bf16.msra.mxu0 0
          %1670 = vmatprep.subr.bf16.mxu0 0
          %1671 = vmatpush1.bf16.msra.mxu0 0
          %1672 = vmatprep.subr.bf16.mxu0 0
          %1673 = vmatpush1.bf16.msra.mxu0 0
          %1674 = vmatprep.subr.bf16.mxu0 0
          %1675 = vmatpush1.bf16.msra.mxu0 0
          %1676 = vmatprep.subr.bf16.mxu0 0
          %1677 = vmatpush1.bf16.msra.mxu0 0
          %1678 = vmatprep.subr.bf16.mxu0 0
          %1679 = vmatpush1.bf16.msra.mxu0 0
          %1680 = vmatprep.subr.bf16.mxu0 0
          %1681 = vmatpush1.bf16.msra.mxu0 0
          %1682 = vmatprep.subr.bf16.mxu0 0
          %1683 = vmatpush1.bf16.msra.mxu0 0
          %1684 = vmatprep.subr.bf16.mxu0 0
          %1685 = vmatpush1.bf16.msra.mxu0 0
          %1686 = vmatprep.subr.bf16.mxu0 0
          %1687 = vmatpush1.bf16.msra.mxu0 0
          %1688 = vmatprep.subr.bf16.mxu0 0
          %1689 = vmatpush1.bf16.msra.mxu0 0
          %1690 = vmatprep.mubr.bf16.mxu0 0
          %1691 = vmatmul.mubr.bf16.gmra.mrb[0].mxu0 %v1653
          %v1692 = vpop.f32.mrb[0].mxu0
          %v1693 = vadd.f32 0.0, %v1692
          %v1694 = vpop.f32.mrb[0].mxu0
          %v1695 = vpop.f32.mrb[0].mxu0
          %v1696 = vpop.f32.mrb[0].mxu0
          %1697 = vdwg.mxu0
          %v1698 = vadd.f32 %v1640, %v1693
          %1699 = vst.msk [vmem:[%s478] sm:$0xff] %vm586, %v1698
        $region80: #{tpu_custom_call.1} parent=47 // pred_fallthru
          _
        %s1700 = sand.u32 %s236, 1
        %s1701 = scalar_lea.sflag [#allocation10], %s1700
        %s1702 = sand.u32 %s236, 1
        %s1703 = smul.addr %s1702, 8
        %s1704 = scalar_lea.vmem [#allocation19], %s1703
        %s1705 = sand.u32 %s266, 1
        %s1706 = scalar_lea.sflag [#allocation21], %s1705
        %s1707 = sand.u32 %s266, 1
        %s1708 = smul.addr %s1707, 8
        %s1709 = scalar_lea.vmem [#allocation20], %s1708
        // Predicated region
        $region81: #{tpu_custom_call.1} parent=47 // pred_check
          %p1710 = pneg %p246
        $region82: #{tpu_custom_call.1} parent=47 // pred_check_branch
          %1712 = sbr.rel (%p1710) target = $region84
        $region83: #{tpu_custom_call.1} parent=47 // pred_region
          %s1714 = ssub.s32 128, 128
          %1715 = vsyncadd %s1701, %s1714
          %s1716 = sadd.s32 %s45, %s44
          %s1717 = smul.addr %s1716, 128
          %s1718 = scalar_lea.hbm %s8, %s1717
          %s1720 = sshll.u32 %s1704, 4
          %s1721 = int_to_ptr.vmem [resolvable:$true] %s1720
          %1723 = dma.vmem_to_hbm [thread:$0]  %s1721, 128, %s1718, %s1701
        $region84: #{tpu_custom_call.1} parent=47 // pred_fallthru
          _
        // Predicated region
        $region85: #{tpu_custom_call.1} parent=47 // pred_check
          %p1724 = pneg %p276
        $region86: #{tpu_custom_call.1} parent=47 // pred_check_branch
          %1726 = sbr.rel (%p1724) target = $region88
        $region87: #{tpu_custom_call.1} parent=47 // pred_region
          %s1728 = ssub.s32 128, 128
          %1729 = vsyncadd %s1706, %s1728
          %s1730 = sadd.s32 %s46, %s45
          %s1731 = sadd.s32 %s1730, %s44
          %s1732 = smul.addr %s1731, 128
          %s1733 = scalar_lea.hbm %s9, %s1732
          %s1735 = sshll.u32 %s1709, 4
          %s1736 = int_to_ptr.vmem [resolvable:$true] %s1735
          %1738 = dma.vmem_to_hbm [thread:$0]  %s1736, 128, %s1733, %s1706
        $region88: #{tpu_custom_call.1} parent=47 // pred_fallthru
          _
      $region48: #{tpu_custom_call.1} parent=5 // pred_fallthru
        _
      %p1739 = scmp.le.s32.totalorder 2, %s34
      // Predicated region
      $region89: #{tpu_custom_call.1} parent=5 // pred_check
        %p1740 = pneg %p1739
      $region90: #{tpu_custom_call.1} parent=5 // pred_check_branch
        %1742 = sbr.rel (%p1740) target = $region92
      $region91: #{tpu_custom_call.1} parent=5 // pred_region
        %s1743 = ssub.s32 %s34, 2
        // Predicated region
        $region93: #{tpu_custom_call.1} parent=91 // pred_check
          %p1744 = pneg %p252
        $region94: #{tpu_custom_call.1} parent=91 // pred_check_branch
          %1746 = sbr.rel (%p1744) target = $region96
        $region95: #{tpu_custom_call.1} parent=91 // pred_region
          %s1747 = sand.u32 %s237, 1
          %s1748 = scalar_lea.sflag [#allocation10], %s1747
          %s1749 = sand.u32 %s237, 1
          %s1750 = smul.addr %s1749, 8
          %s1751 = scalar_lea.vmem [#allocation19], %s1750
          %1752 = dma.done %s1748, 128
        $region96: #{tpu_custom_call.1} parent=91 // pred_fallthru
          _
        // Predicated region
        $region97: #{tpu_custom_call.1} parent=91 // pred_check
          %p1753 = pneg %p282
        $region98: #{tpu_custom_call.1} parent=91 // pred_check_branch
          %1755 = sbr.rel (%p1753) target = $region100
        $region99: #{tpu_custom_call.1} parent=91 // pred_region
          %s1756 = sand.u32 %s267, 1
          %s1757 = scalar_lea.sflag [#allocation21], %s1756
          %s1758 = sand.u32 %s267, 1
          %s1759 = smul.addr %s1758, 8
          %s1760 = scalar_lea.vmem [#allocation20], %s1759
          %1761 = dma.done %s1757, 128
        $region100: #{tpu_custom_call.1} parent=91 // pred_fallthru
          _
      $region92: #{tpu_custom_call.1} parent=5 // pred_fallthru
        _
    $region6: #{tpu_custom_call.1} parent=1 // loop_footer
      %s38 = sadd.s32 1, %s34
    $region7: #{tpu_custom_call.1} parent=1 // loop_footer_branch
      %33 = sbr.rel target = $region3
    $region8: #{tpu_custom_call.1} parent=1 // loop_exit
      _
    %1762 = vsyncpa [#allocation9], 1
    %s1763 = scalar_lea.sflag [#allocation9], 1
    %1764 = vsyncpa %s1763, 1
    %1765 = vsyncpa [#allocation12], 1
    %s1766 = scalar_lea.sflag [#allocation12], 1
    %1767 = vsyncpa %s1766, 1
    %1768 = vsyncpa [#allocation15], 1
    %1769 = vsyncpa [#allocation18], 1
    %1770 = vsyncpa [#allocation10], 1
    %s1771 = scalar_lea.sflag [#allocation10], 1
    %1772 = vsyncpa %s1771, 1
    %1773 = vsyncpa [#allocation21], 1
    %s1774 = scalar_lea.sflag [#allocation21], 1
    %1775 = vsyncpa %s1774, 1

</llo_original>
